<compile_context>
chip_gen: v7x
topology: tpu7x:2x2x1
jax: 0.10.0
libtpu: 0.0.40
codegen_flags: <defaults>
</compile_context>

<pallas_src>
import functools

import jax
import jax.numpy as jnp
from jax import lax
from jax.experimental import pallas as pl
from jax.experimental.pallas import tpu as pltpu


LANE = 128  # TPU lane width; channel dims are padded to multiples of this for dense stores.


# ----------------------------------------------------------------------------
# Fused activations (FusedMBConv act_layer: EfficientViT uses (Hardswish, None))
# ----------------------------------------------------------------------------
def _act(y, name):
    if name == "hardswish":
        return y * jnp.clip(y + 3.0, 0.0, 6.0) * (1.0 / 6.0)
    return y  # identity


# ----------------------------------------------------------------------------
# Pallas kernel: one grid step computes output rows [r*th, r*th+th) of batch image b.
#   spatial conv  -> tap-accumulated matmuls on the f32 MXU accumulator (+BN shift, Hardswish)
#   point 1x1 conv-> second matmul on the bf16-cast intermediate (+BN shift), fused in-kernel.
# ----------------------------------------------------------------------------
def _fused_mbconv_kernel(x_ref, w1_ref, s1_ref, w2_ref, s2_ref, o_ref, *,
                         th, th_in, Wo, kh, kw, sh, sw, acts):
    # x_ref : (1, Hp, Wp, Cin)      bf16 padded image of batch element b (resident per-b)
    # w1_ref: (kh*kw, Cin, Cmid_p)  bf16, BN scale folded, tap-major (dy, dx)
    # s1_ref: (1, Cmid_p)           f32 BN shift (spatial conv)
    # w2_ref: (Cmid_p, Cout_p)      bf16, BN scale folded
    # s2_ref: (1, Cout_p)           f32 BN shift (point conv)
    # o_ref : (1, th, Wo, Cout_p)   output tile
    cin = w1_ref.shape[1]
    cmid = w1_ref.shape[-1]
    cout = w2_ref.shape[-1]

    # Input rows needed for this output row tile.
    row0 = pl.multiple_of(pl.program_id(1) * (th * sh), th * sh)
    xs = x_ref[0, pl.ds(row0, th_in), :, :]                       # (th_in, Wp, Cin) bf16

    # Spatial KxK conv: in-register im2col (no HBM patches slab), one matmul per tap.
    acc = jnp.zeros((th * Wo, cmid), jnp.float32)
    for dy in range(kh):
        for dx in range(kw):
            tap = lax.slice(
                xs,
                (dy, dx, 0),
                (dy + (th - 1) * sh + 1, dx + (Wo - 1) * sw + 1, cin),
                (sh, sw, 1),
            )                                                      # (th, Wo, Cin)
            tap = tap.reshape(th * Wo, cin)
            acc = acc + jnp.dot(tap, w1_ref[dy * kw + dx],
                                preferred_element_type=jnp.float32)

    h = _act(acc + s1_ref[...], acts[0])                           # (th*Wo, Cmid_p) f32

    # Point 1x1 conv fused (intermediate never touches HBM); bf16 operands, f32 accumulation.
    y = jnp.dot(h.astype(jnp.bfloat16), w2_ref[...],
                preferred_element_type=jnp.float32)
    y = _act(y + s2_ref[...], acts[1])                             # (th*Wo, Cout_p)

    o_ref[...] = y.reshape(1, th, Wo, cout).astype(o_ref.dtype)


# ----------------------------------------------------------------------------
# FusedMBConv forward (single fused pallas_call)
# ----------------------------------------------------------------------------
def fused_mbconv_forward(x_nchw, fp, *, out_channels, kernel_size, stride,
                         acts=("hardswish", "identity"), th=None,
                         out_dtype=jnp.float32):
    kh, kw = kernel_size
    sh, sw = stride
    ph, pw = kh // 2, kw // 2
    B, Cin, H, W = x_nchw.shape
    Ho = (H + 2 * ph - kh) // sh + 1
    Wo = (W + 2 * pw - kw) // sw + 1
    Cmid_p = fp["spatial_wm"].shape[-1]
    Cout_p = fp["point_wm"].shape[-1]

    # Output row tile: ~1024 matmul rows per grid step, but keep >=2 row tiles per image so the
    # ("parallel", "parallel") grid has something to shard across v7x's two TensorCores.
    if th is None:
        th = max(1, min(Ho, max(1, 1024 // max(Wo, 1))))
        if th == Ho and Ho > 1:
            th = pl.cdiv(Ho, 2)
    th = min(th, Ho)
    nR = pl.cdiv(Ho, th)
    Ho_pad = nR * th
    th_in = (th - 1) * sh + kh

    # Boundary conversion: NCHW -> padded channels-last bf16 (the only XLA-side layout work).
    x = jnp.transpose(x_nchw, (0, 2, 3, 1)).astype(jnp.bfloat16)
    Hp = max(H + 2 * ph, (Ho_pad - 1) * sh + kh)
    Wp = max(W + 2 * pw, (Wo - 1) * sw + kw)
    x = jnp.pad(x, ((0, 0), (ph, Hp - H - ph), (pw, Wp - W - pw), (0, 0)))

    flops = 2 * B * Ho_pad * Wo * (kh * kw * Cin * Cmid_p + Cmid_p * Cout_p)
    bytes_accessed = int(
        B * Hp * Wp * Cin * 2
        + kh * kw * Cin * Cmid_p * 2
        + Cmid_p * Cout_p * 2
        + (Cmid_p + Cout_p) * 4
        + B * Ho_pad * Wo * Cout_p * jnp.dtype(out_dtype).itemsize
    )

    kernel = functools.partial(
        _fused_mbconv_kernel,
        th=th, th_in=th_in, Wo=Wo, kh=kh, kw=kw, sh=sh, sw=sw, acts=acts)

    out = pl.pallas_call(
        kernel,
        out_shape=jax.ShapeDtypeStruct((B, Ho_pad, Wo, Cout_p), out_dtype),
        grid=(B, nR),
        in_specs=[
            # Full padded image of batch b; block index is constant in r, so Pallas DMAs it
            # once per batch element and re-uses it for every row tile.
            pl.BlockSpec((1, Hp, Wp, Cin), lambda b, r: (b, 0, 0, 0)),
            pl.BlockSpec((kh * kw, Cin, Cmid_p), lambda b, r: (0, 0, 0)),  # resident weight 1
            pl.BlockSpec((1, Cmid_p), lambda b, r: (0, 0)),                # BN shift 1
            pl.BlockSpec((Cmid_p, Cout_p), lambda b, r: (0, 0)),           # resident weight 2
            pl.BlockSpec((1, Cout_p), lambda b, r: (0, 0)),                # BN shift 2
        ],
        out_specs=pl.BlockSpec((1, th, Wo, Cout_p), lambda b, r: (b, r, 0, 0)),
        compiler_params=pltpu.CompilerParams(
            dimension_semantics=("parallel", "parallel"),
            vmem_limit_bytes=32 * 1024 * 1024,   # safe on v5e/v6e/v7x for these tile sizes
        ),
        cost_estimate=pl.CostEstimate(flops=flops, transcendentals=0,
                                      bytes_accessed=bytes_accessed),
    )(x, fp["spatial_wm"], fp["spatial_shift"], fp["point_wm"], fp["point_shift"])

    # Strip row / lane padding and go back to NCHW at the module boundary.
    out = out[:, :Ho, :, :out_channels]
    return jnp.transpose(out, (0, 3, 1, 2))


# ----------------------------------------------------------------------------
# Parameters (PyTorch layout) + kernel-ready folding
#   * BN scale folded into bf16 weight columns, BN shift kept as f32 vectors.
#   * Cmid / Cout padded to multiples of 128 (zero columns / zero shifts) for lane-dense stores.
# ----------------------------------------------------------------------------
def make_params(key, *, in_channels, out_channels, kernel_size, expand_ratio):
    mid = int(round(in_channels * expand_ratio))
    kh, kw = kernel_size
    bn_eps = 1e-5
    ks = jax.random.split(key, 4)

    def folded_bn(k, c):
        k1, k2, k3, k4 = jax.random.split(k, 4)
        gamma = jax.random.uniform(k1, (c,), minval=0.8, maxval=1.2)
        beta = 0.1 * jax.random.normal(k2, (c,))
        mean = 0.1 * jax.random.normal(k3, (c,))
        var = jax.random.uniform(k4, (c,), minval=0.8, maxval=1.2)
        scale = gamma / jnp.sqrt(var + bn_eps)
        shift = beta - mean * scale
        return scale.astype(jnp.float32), shift.astype(jnp.float32)

    p = {}
    p["spatial_w"] = (0.1 * jax.random.normal(ks[0], (mid, in_channels, kh, kw))).astype(jnp.float32)
    p["spatial_scale"], p["spatial_shift"] = folded_bn(ks[1], mid)
    p["point_w"] = (0.1 * jax.random.normal(ks[2], (out_channels, mid, 1, 1))).astype(jnp.float32)
    p["point_scale"], p["point_shift"] = folded_bn(ks[3], out_channels)
    return p


def fold_params(p, lane=LANE):
    mid, cin, kh, kw = p["spatial_w"].shape
    cout = p["point_w"].shape[0]
    mid_p = pl.cdiv(mid, lane) * lane
    cout_p = pl.cdiv(cout, lane) * lane

    # Spatial weight: (mid, cin, kh, kw) -> tap-major (kh*kw, cin, mid), BN scale folded.
    w1 = jnp.transpose(p["spatial_w"], (2, 3, 1, 0)).reshape(kh * kw, cin, mid)
    w1 = w1 * p["spatial_scale"][None, None, :]
    w1 = jnp.pad(w1, ((0, 0), (0, 0), (0, mid_p - mid)))
    s1 = jnp.pad(p["spatial_shift"], (0, mid_p - mid)).reshape(1, mid_p)

    # Point weight: (cout, mid, 1, 1) -> (mid, cout), BN scale folded.
    w2 = p["point_w"][:, :, 0, 0].T * p["point_scale"][None, :]
    w2 = jnp.pad(w2, ((0, mid_p - mid), (0, cout_p - cout)))
    s2 = jnp.pad(p["point_shift"], (0, cout_p - cout)).reshape(1, cout_p)

    return {
        "spatial_wm": w1.astype(jnp.bfloat16),
        "spatial_shift": s1.astype(jnp.float32),
        "point_wm": w2.astype(jnp.bfloat16),
        "point_shift": s2.astype(jnp.float32),
    }


# ----------------------------------------------------------------------------
# Pure-JAX reference (conv + folded BN + Hardswish, conv + folded BN), mirroring the
# bf16 operand / intermediate rounding of the TPU kernel path so the check is tight.
# ----------------------------------------------------------------------------
def reference_forward(x, p, *, stride):
    HI = lax.Precision.HIGHEST
    sh, sw = stride

    def b16(a):
        return a.astype(jnp.bfloat16).astype(jnp.float32)

    kh, kw = p["spatial_w"].shape[2], p["spatial_w"].shape[3]
    w1 = b16(p["spatial_w"] * p["spatial_scale"][:, None, None, None])
    y = lax.conv_general_dilated(b16(x), w1, (sh, sw),
                                 ((kh // 2, kh // 2), (kw // 2, kw // 2)),
                                 dimension_numbers=("NCHW", "OIHW", "NCHW"), precision=HI)
    y = y + p["spatial_shift"][None, :, None, None]
    y = y * jnp.clip(y + 3.0, 0.0, 6.0) * (1.0 / 6.0)      # Hardswish
    y = b16(y)                                             # intermediate rounded to bf16

    w2 = b16(p["point_w"] * p["point_scale"][:, None, None, None])
    y = lax.conv_general_dilated(y, w2, (1, 1), ((0, 0), (0, 0)),
                                 dimension_numbers=("NCHW", "OIHW", "NCHW"), precision=HI)
    return y + p["point_shift"][None, :, None, None]


if __name__ == "__main__":
    # FusedMBConv config: 3x3 stride-1 spatial conv, expand_ratio=4, (Hardswish, None) acts.
    in_channels, out_channels = 16, 16
    kernel_size, stride = (3, 3), (1, 1)
    expand_ratio = 4.0
    B, H, W = 2, 16, 16

    key = jax.random.PRNGKey(0)
    kx, kp = jax.random.split(key)
    x = jax.random.normal(kx, (B, in_channels, H, W), dtype=jnp.float32)

    params = make_params(kp, in_channels=in_channels, out_channels=out_channels,
                         kernel_size=kernel_size, expand_ratio=expand_ratio)
    fparams = fold_params(params)

    fwd = jax.jit(functools.partial(
        fused_mbconv_forward, out_channels=out_channels,
        kernel_size=kernel_size, stride=stride))
    out = fwd(x, fparams)
    jax.block_until_ready(out)

    ref = reference_forward(x, params, stride=stride)
    Ho = (H + 2 * (kernel_size[0] // 2) - kernel_size[0]) // stride[0] + 1
    Wo = (W + 2 * (kernel_size[1] // 2) - kernel_size[1]) // stride[1] + 1
    assert out.shape == (B, out_channels, Ho, Wo), out.shape
    max_err = float(jnp.max(jnp.abs(out - ref)))
    assert jnp.allclose(out, ref, atol=2e-2, rtol=2e-2), max_err

    print("KERNEL_OK")
</pallas_src>

<mosaic_0001>
module attributes {stable_mosaic.version = 11 : i64} {
  func.func @_fused_mbconv_kernel(%arg0: i32, %arg1: i32, %arg2: memref<1x18x18x16xbf16, #tpu.memory_space<vmem>>, %arg3: memref<9x16x128xbf16, #tpu.memory_space<vmem>>, %arg4: memref<1x128xf32, #tpu.memory_space<vmem>>, %arg5: memref<128x128xbf16, #tpu.memory_space<vmem>>, %arg6: memref<1x128xf32, #tpu.memory_space<vmem>>, %arg7: memref<1x8x16x128xf32, #tpu.memory_space<vmem>>) attributes {dimension_semantics = [#tpu.dimension_semantics<parallel>, #tpu.dimension_semantics<parallel>], iteration_bounds = array<i64: 2, 2>, scalar_prefetch = 0 : i64, scratch_operands = 0 : i64, tpu.core_type = #tpu.core_type<tc>, window_params = [{transform_indices = @transform_0, window_bounds = array<i64: 1, 18, 18, 16>}, {pipeline_mode = #tpu.pipeline_mode<synchronous>, transform_indices = @transform_1, window_bounds = array<i64: 9, 16, 128>}, {pipeline_mode = #tpu.pipeline_mode<synchronous>, transform_indices = @transform_2, window_bounds = array<i64: 1, 128>}, {pipeline_mode = #tpu.pipeline_mode<synchronous>, transform_indices = @transform_3, window_bounds = array<i64: 128, 128>}, {pipeline_mode = #tpu.pipeline_mode<synchronous>, transform_indices = @transform_4, window_bounds = array<i64: 1, 128>}, {transform_indices = @transform_5, window_bounds = array<i64: 1, 8, 16, 128>}]} {
    %c8_i32 = arith.constant 8 : i32
    %0 = arith.muli %arg1, %c8_i32 : i32
    %1 = tpu.assume_multiple %0, 8 : i32
    %c0 = arith.constant 0 : index
    %2 = arith.index_cast %1 : i32 to index
    %c0_0 = arith.constant 0 : index
    %c0_1 = arith.constant 0 : index
    %3 = vector.load %arg2[%c0, %2, %c0_0, %c0_1] : memref<1x18x18x16xbf16, #tpu.memory_space<vmem>>, vector<1x10x18x16xbf16>
    %4 = vector.shape_cast %3 : vector<1x10x18x16xbf16> to vector<10x18x16xbf16>
    %cst = arith.constant 0.000000e+00 : f32
    %5 = vector.broadcast %cst : f32 to vector<128x128xf32>
    %6 = vector.extract_strided_slice %4 {offsets = [0, 0, 0], sizes = [8, 16, 16], strides = [1, 1, 1]} : vector<10x18x16xbf16> to vector<8x16x16xbf16>
    %7 = vector.shape_cast %6 : vector<8x16x16xbf16> to vector<128x16xbf16>
    %c0_2 = arith.constant 0 : index
    %c0_3 = arith.constant 0 : index
    %c0_4 = arith.constant 0 : index
    %8 = vector.load %arg3[%c0_2, %c0_3, %c0_4] : memref<9x16x128xbf16, #tpu.memory_space<vmem>>, vector<1x16x128xbf16>
    %9 = vector.shape_cast %8 : vector<1x16x128xbf16> to vector<16x128xbf16>
    %cst_5 = arith.constant dense<0.000000e+00> : vector<128x128xf32>
    %10 = tpu.matmul %7, %9, %cst_5 {dimension_numbers = #tpu.dot_dimension_numbers<[1], [0], [0], [1], [0, 0, 1, 1], [], []>} : vector<128x16xbf16>, vector<16x128xbf16>, vector<128x128xf32> -> vector<128x128xf32>
    %11 = arith.addf %5, %10 : vector<128x128xf32>
    %12 = vector.extract_strided_slice %4 {offsets = [0, 1, 0], sizes = [8, 16, 16], strides = [1, 1, 1]} : vector<10x18x16xbf16> to vector<8x16x16xbf16>
    %13 = vector.shape_cast %12 : vector<8x16x16xbf16> to vector<128x16xbf16>
    %c1 = arith.constant 1 : index
    %c0_6 = arith.constant 0 : index
    %c0_7 = arith.constant 0 : index
    %14 = vector.load %arg3[%c1, %c0_6, %c0_7] : memref<9x16x128xbf16, #tpu.memory_space<vmem>>, vector<1x16x128xbf16>
    %15 = vector.shape_cast %14 : vector<1x16x128xbf16> to vector<16x128xbf16>
    %cst_8 = arith.constant dense<0.000000e+00> : vector<128x128xf32>
    %16 = tpu.matmul %13, %15, %cst_8 {dimension_numbers = #tpu.dot_dimension_numbers<[1], [0], [0], [1], [0, 0, 1, 1], [], []>} : vector<128x16xbf16>, vector<16x128xbf16>, vector<128x128xf32> -> vector<128x128xf32>
    %17 = arith.addf %11, %16 : vector<128x128xf32>
    %18 = vector.extract_strided_slice %4 {offsets = [0, 2, 0], sizes = [8, 16, 16], strides = [1, 1, 1]} : vector<10x18x16xbf16> to vector<8x16x16xbf16>
    %19 = vector.shape_cast %18 : vector<8x16x16xbf16> to vector<128x16xbf16>
    %c2 = arith.constant 2 : index
    %c0_9 = arith.constant 0 : index
    %c0_10 = arith.constant 0 : index
    %20 = vector.load %arg3[%c2, %c0_9, %c0_10] : memref<9x16x128xbf16, #tpu.memory_space<vmem>>, vector<1x16x128xbf16>
    %21 = vector.shape_cast %20 : vector<1x16x128xbf16> to vector<16x128xbf16>
    %cst_11 = arith.constant dense<0.000000e+00> : vector<128x128xf32>
    %22 = tpu.matmul %19, %21, %cst_11 {dimension_numbers = #tpu.dot_dimension_numbers<[1], [0], [0], [1], [0, 0, 1, 1], [], []>} : vector<128x16xbf16>, vector<16x128xbf16>, vector<128x128xf32> -> vector<128x128xf32>
    %23 = arith.addf %17, %22 : vector<128x128xf32>
    %24 = vector.extract_strided_slice %4 {offsets = [1, 0, 0], sizes = [8, 16, 16], strides = [1, 1, 1]} : vector<10x18x16xbf16> to vector<8x16x16xbf16>
    %25 = vector.shape_cast %24 : vector<8x16x16xbf16> to vector<128x16xbf16>
    %c3 = arith.constant 3 : index
    %c0_12 = arith.constant 0 : index
    %c0_13 = arith.constant 0 : index
    %26 = vector.load %arg3[%c3, %c0_12, %c0_13] : memref<9x16x128xbf16, #tpu.memory_space<vmem>>, vector<1x16x128xbf16>
    %27 = vector.shape_cast %26 : vector<1x16x128xbf16> to vector<16x128xbf16>
    %cst_14 = arith.constant dense<0.000000e+00> : vector<128x128xf32>
    %28 = tpu.matmul %25, %27, %cst_14 {dimension_numbers = #tpu.dot_dimension_numbers<[1], [0], [0], [1], [0, 0, 1, 1], [], []>} : vector<128x16xbf16>, vector<16x128xbf16>, vector<128x128xf32> -> vector<128x128xf32>
    %29 = arith.addf %23, %28 : vector<128x128xf32>
    %30 = vector.extract_strided_slice %4 {offsets = [1, 1, 0], sizes = [8, 16, 16], strides = [1, 1, 1]} : vector<10x18x16xbf16> to vector<8x16x16xbf16>
    %31 = vector.shape_cast %30 : vector<8x16x16xbf16> to vector<128x16xbf16>
    %c4 = arith.constant 4 : index
    %c0_15 = arith.constant 0 : index
    %c0_16 = arith.constant 0 : index
    %32 = vector.load %arg3[%c4, %c0_15, %c0_16] : memref<9x16x128xbf16, #tpu.memory_space<vmem>>, vector<1x16x128xbf16>
    %33 = vector.shape_cast %32 : vector<1x16x128xbf16> to vector<16x128xbf16>
    %cst_17 = arith.constant dense<0.000000e+00> : vector<128x128xf32>
    %34 = tpu.matmul %31, %33, %cst_17 {dimension_numbers = #tpu.dot_dimension_numbers<[1], [0], [0], [1], [0, 0, 1, 1], [], []>} : vector<128x16xbf16>, vector<16x128xbf16>, vector<128x128xf32> -> vector<128x128xf32>
    %35 = arith.addf %29, %34 : vector<128x128xf32>
    %36 = vector.extract_strided_slice %4 {offsets = [1, 2, 0], sizes = [8, 16, 16], strides = [1, 1, 1]} : vector<10x18x16xbf16> to vector<8x16x16xbf16>
    %37 = vector.shape_cast %36 : vector<8x16x16xbf16> to vector<128x16xbf16>
    %c5 = arith.constant 5 : index
    %c0_18 = arith.constant 0 : index
    %c0_19 = arith.constant 0 : index
    %38 = vector.load %arg3[%c5, %c0_18, %c0_19] : memref<9x16x128xbf16, #tpu.memory_space<vmem>>, vector<1x16x128xbf16>
    %39 = vector.shape_cast %38 : vector<1x16x128xbf16> to vector<16x128xbf16>
    %cst_20 = arith.constant dense<0.000000e+00> : vector<128x128xf32>
    %40 = tpu.matmul %37, %39, %cst_20 {dimension_numbers = #tpu.dot_dimension_numbers<[1], [0], [0], [1], [0, 0, 1, 1], [], []>} : vector<128x16xbf16>, vector<16x128xbf16>, vector<128x128xf32> -> vector<128x128xf32>
    %41 = arith.addf %35, %40 : vector<128x128xf32>
    %42 = vector.extract_strided_slice %4 {offsets = [2, 0, 0], sizes = [8, 16, 16], strides = [1, 1, 1]} : vector<10x18x16xbf16> to vector<8x16x16xbf16>
    %43 = vector.shape_cast %42 : vector<8x16x16xbf16> to vector<128x16xbf16>
    %c6 = arith.constant 6 : index
    %c0_21 = arith.constant 0 : index
    %c0_22 = arith.constant 0 : index
    %44 = vector.load %arg3[%c6, %c0_21, %c0_22] : memref<9x16x128xbf16, #tpu.memory_space<vmem>>, vector<1x16x128xbf16>
    %45 = vector.shape_cast %44 : vector<1x16x128xbf16> to vector<16x128xbf16>
    %cst_23 = arith.constant dense<0.000000e+00> : vector<128x128xf32>
    %46 = tpu.matmul %43, %45, %cst_23 {dimension_numbers = #tpu.dot_dimension_numbers<[1], [0], [0], [1], [0, 0, 1, 1], [], []>} : vector<128x16xbf16>, vector<16x128xbf16>, vector<128x128xf32> -> vector<128x128xf32>
    %47 = arith.addf %41, %46 : vector<128x128xf32>
    %48 = vector.extract_strided_slice %4 {offsets = [2, 1, 0], sizes = [8, 16, 16], strides = [1, 1, 1]} : vector<10x18x16xbf16> to vector<8x16x16xbf16>
    %49 = vector.shape_cast %48 : vector<8x16x16xbf16> to vector<128x16xbf16>
    %c7 = arith.constant 7 : index
    %c0_24 = arith.constant 0 : index
    %c0_25 = arith.constant 0 : index
    %50 = vector.load %arg3[%c7, %c0_24, %c0_25] : memref<9x16x128xbf16, #tpu.memory_space<vmem>>, vector<1x16x128xbf16>
    %51 = vector.shape_cast %50 : vector<1x16x128xbf16> to vector<16x128xbf16>
    %cst_26 = arith.constant dense<0.000000e+00> : vector<128x128xf32>
    %52 = tpu.matmul %49, %51, %cst_26 {dimension_numbers = #tpu.dot_dimension_numbers<[1], [0], [0], [1], [0, 0, 1, 1], [], []>} : vector<128x16xbf16>, vector<16x128xbf16>, vector<128x128xf32> -> vector<128x128xf32>
    %53 = arith.addf %47, %52 : vector<128x128xf32>
    %54 = vector.extract_strided_slice %4 {offsets = [2, 2, 0], sizes = [8, 16, 16], strides = [1, 1, 1]} : vector<10x18x16xbf16> to vector<8x16x16xbf16>
    %55 = vector.shape_cast %54 : vector<8x16x16xbf16> to vector<128x16xbf16>
    %c8 = arith.constant 8 : index
    %c0_27 = arith.constant 0 : index
    %c0_28 = arith.constant 0 : index
    %56 = vector.load %arg3[%c8, %c0_27, %c0_28] : memref<9x16x128xbf16, #tpu.memory_space<vmem>>, vector<1x16x128xbf16>
    %57 = vector.shape_cast %56 : vector<1x16x128xbf16> to vector<16x128xbf16>
    %cst_29 = arith.constant dense<0.000000e+00> : vector<128x128xf32>
    %58 = tpu.matmul %55, %57, %cst_29 {dimension_numbers = #tpu.dot_dimension_numbers<[1], [0], [0], [1], [0, 0, 1, 1], [], []>} : vector<128x16xbf16>, vector<16x128xbf16>, vector<128x128xf32> -> vector<128x128xf32>
    %59 = arith.addf %53, %58 : vector<128x128xf32>
    %c0_30 = arith.constant 0 : index
    %c0_31 = arith.constant 0 : index
    %60 = vector.load %arg4[%c0_30, %c0_31] : memref<1x128xf32, #tpu.memory_space<vmem>>, vector<1x128xf32>
    %61 = vector.broadcast %60 : vector<1x128xf32> to vector<128x128xf32>
    %62 = arith.addf %59, %61 : vector<128x128xf32>
    %cst_32 = arith.constant 3.000000e+00 : f32
    %63 = vector.broadcast %cst_32 : f32 to vector<128x128xf32>
    %64 = arith.addf %62, %63 : vector<128x128xf32>
    %cst_33 = arith.constant 0.000000e+00 : f32
    %cst_34 = arith.constant 6.000000e+00 : f32
    %65 = vector.broadcast %cst_33 : f32 to vector<128x128xf32>
    %66 = arith.maximumf %65, %64 : vector<128x128xf32>
    %67 = vector.broadcast %cst_34 : f32 to vector<128x128xf32>
    %68 = arith.minimumf %67, %66 : vector<128x128xf32>
    %69 = arith.mulf %62, %68 : vector<128x128xf32>
    %cst_35 = arith.constant 0.166666672 : f32
    %70 = vector.broadcast %cst_35 : f32 to vector<128x128xf32>
    %71 = arith.mulf %69, %70 : vector<128x128xf32>
    %72 = arith.truncf %71 : vector<128x128xf32> to vector<128x128xbf16>
    %c0_36 = arith.constant 0 : index
    %c0_37 = arith.constant 0 : index
    %73 = vector.load %arg5[%c0_36, %c0_37] : memref<128x128xbf16, #tpu.memory_space<vmem>>, vector<128x128xbf16>
    %cst_38 = arith.constant dense<0.000000e+00> : vector<128x128xf32>
    %74 = tpu.matmul %72, %73, %cst_38 {dimension_numbers = #tpu.dot_dimension_numbers<[1], [0], [0], [1], [0, 0, 1, 1], [], []>} : vector<128x128xbf16>, vector<128x128xbf16>, vector<128x128xf32> -> vector<128x128xf32>
    %c0_39 = arith.constant 0 : index
    %c0_40 = arith.constant 0 : index
    %75 = vector.load %arg6[%c0_39, %c0_40] : memref<1x128xf32, #tpu.memory_space<vmem>>, vector<1x128xf32>
    %76 = vector.broadcast %75 : vector<1x128xf32> to vector<128x128xf32>
    %77 = arith.addf %74, %76 : vector<128x128xf32>
    %78 = vector.shape_cast %77 : vector<128x128xf32> to vector<1x8x16x128xf32>
    %c0_41 = arith.constant 0 : index
    %c0_42 = arith.constant 0 : index
    %c0_43 = arith.constant 0 : index
    %c0_44 = arith.constant 0 : index
    %79 = vector.load %arg7[%c0_41, %c0_42, %c0_43, %c0_44] : memref<1x8x16x128xf32, #tpu.memory_space<vmem>>, vector<1x8x16x128xf32>
    tpu.vector_store %arg7[%c0_41, %c0_42, %c0_43, %c0_44], %78 {strides = array<i32>} : memref<1x8x16x128xf32, #tpu.memory_space<vmem>>, vector<1x8x16x128xf32>,
    return
  }
  func.func @transform_0(%arg0: i32, %arg1: i32) -> (i32, i32, i32, i32) {
    %c0_i32 = arith.constant 0 : i32
    %c0_i32_0 = arith.constant 0 : i32
    %c0_i32_1 = arith.constant 0 : i32
    %c0_i32_2 = arith.constant 0 : i32
    return %arg0, %c0_i32, %c0_i32_0, %c0_i32_1 : i32, i32, i32, i32
  }
  func.func @transform_1(%arg0: i32, %arg1: i32) -> (i32, i32, i32) {
    %c0_i32 = arith.constant 0 : i32
    %c0_i32_0 = arith.constant 0 : i32
    %c0_i32_1 = arith.constant 0 : i32
    %c0_i32_2 = arith.constant 0 : i32
    return %c0_i32, %c0_i32_0, %c0_i32_1 : i32, i32, i32
  }
  func.func @transform_2(%arg0: i32, %arg1: i32) -> (i32, i32) {
    %c0_i32 = arith.constant 0 : i32
    %c0_i32_0 = arith.constant 0 : i32
    %c0_i32_1 = arith.constant 0 : i32
    return %c0_i32, %c0_i32_0 : i32, i32
  }
  func.func @transform_3(%arg0: i32, %arg1: i32) -> (i32, i32) {
    %c0_i32 = arith.constant 0 : i32
    %c0_i32_0 = arith.constant 0 : i32
    %c0_i32_1 = arith.constant 0 : i32
    return %c0_i32, %c0_i32_0 : i32, i32
  }
  func.func @transform_4(%arg0: i32, %arg1: i32) -> (i32, i32) {
    %c0_i32 = arith.constant 0 : i32
    %c0_i32_0 = arith.constant 0 : i32
    %c0_i32_1 = arith.constant 0 : i32
    return %c0_i32, %c0_i32_0 : i32, i32
  }
  func.func @transform_5(%arg0: i32, %arg1: i32) -> (i32, i32, i32, i32) {
    %c0_i32 = arith.constant 0 : i32
    %c0_i32_0 = arith.constant 0 : i32
    %c0_i32_1 = arith.constant 0 : i32
    return %arg0, %arg1, %c0_i32, %c0_i32_0 : i32, i32, i32, i32
  }
}

</mosaic_0001>

<llo_original>
// kernel: fused_mbconv_forward.1
$region0: #{fused_mbconv_forward.1}
  #allocation0 [shape = 'u32[]', space=smem, size = 0x4, offset = 0x4, fixed_abs, tag = 'smem constant byte address 0x4 - core index']
  #allocation1 [shape = 'u32[144,128]{1,0:T(1,128)}', space=vmem, size = 0x12000, scoped, tag = 'internal scratch']
  %s0 = inlined_call_operand.vmem [shape: bf16[2,18,18,16], index: 0, kind: input, shape index: {}]
  %s1 = inlined_call_operand.vmem [shape: bf16[9,16,128], index: 1, kind: input, shape index: {}]
  %s2 = inlined_call_operand.vmem [shape: f32[1,128], index: 2, kind: input, shape index: {}]
  %s3 = inlined_call_operand.vmem [shape: bf16[128,128], index: 3, kind: input, shape index: {}]
  %s4 = inlined_call_operand.vmem [shape: f32[1,128], index: 4, kind: input, shape index: {}]
  %s5 = inlined_call_operand.vmem [shape: f32[2,16,16,128], index: 5, kind: output, shape index: {}]
  %s6 = sld [smem:[#allocation0]]
  $region53: #{fused_mbconv_forward.1} parent=0
    _
  %s8 = ssub.s32 1, %s6
  %s9 = scalar_select 0, %s8, %s6
  loop: start=0, step=1, limit=6
  $region2: #{fused_mbconv_forward.1} parent=0 // loop_pre_header
    _
  $region3: #{fused_mbconv_forward.1} parent=0 // loop_header
    %s11 = sphi 0, %s15
    %p12 = scmp.ge.s32.totalorder %s11, 6
    %s18 = sphi 0, %s30
    %s19 = sphi 0, %s26
    %s20 = sphi 0, %s18
    %s21 = sphi 0, %s19
    %s22 = sphi 0, %s20
    %s23 = sphi 0, %s21
    %s33 = sphi 0, %s35
    %s36 = sphi 0, %s33
    %s37 = sphi 0, %s36
    %s53 = sphi 0, %s37
    %s57 = sphi 0, %s57
    %s59 = sphi 0, %s57
    %s60 = sphi 0, %s59
    %s74 = sphi 0, %s60
    %s78 = sphi 0, %s78
    %s80 = sphi 0, %s78
    %s81 = sphi 0, %s80
    %s95 = sphi 0, %s81
    %s99 = sphi 0, %s99
    %s101 = sphi 0, %s99
    %s102 = sphi 0, %s101
    %s116 = sphi 0, %s102
    %s120 = sphi 0, %s120
    %s122 = sphi 0, %s120
    %s123 = sphi 0, %s122
    %s137 = sphi 0, %s123
    %s145 = sphi 0, %s147
    %s148 = sphi 0, %s145
    %s149 = sphi 0, %s148
    %s165 = sphi 0, %s149
  $region4: #{fused_mbconv_forward.1} parent=0 // loop_header_branch
    %14 = sbr.rel (%p12) target = $region8
  $region5: #{fused_mbconv_forward.1} parent=0 // loop_body
    %s16 = ssub.s32 %s11, 1
    %s17 = ssub.s32 %s11, 2
    %s24 = sadd.s32 1, %s19
    %p25 = scmp.ge.s32.totalorder %s24, 2
    %s26 = scalar_select %p25, 0, %s24
    %s27 = sadd.s32 1, %s18
    %s28 = scalar_select %p25, %s27, %s18
    %p29 = scmp.ge.s32.totalorder %s28, 2
    %s30 = scalar_select %p29, 0, %s28
    %s31 = ssub.s32 %s18, %s30
    %p32 = scmp.eq.s32.totalorder %s31, 0
    %s34 = sadd.s32 %s33, 1
    %s35 = scalar_select %p32, %s33, %s34
    %p38 = pneg %p32
    %p39 = scmp.eq.s32.totalorder %s11, 3
    %p40 = por %p38, %p39
    %p41 = scmp.ne.s32.totalorder %s33, %s36
    %p42 = scmp.eq.s32.totalorder %s11, 0
    %p43 = por %p41, %p42
    %p44 = scmp.ne.s32.totalorder %s33, %s36
    %p45 = scmp.eq.s32.totalorder %s16, 3
    %p46 = por %p44, %p45
    %p47 = scmp.ne.s32.totalorder %s36, %s37
    %p48 = scmp.eq.s32.totalorder %s16, 0
    %p49 = por %p47, %p48
    %p50 = scmp.ne.s32.totalorder %s36, %s37
    %p51 = scmp.eq.s32.totalorder %s17, 3
    %p52 = por %p50, %p51
    %p54 = scmp.ne.s32.totalorder %s37, %s53
    %p55 = scmp.eq.s32.totalorder %s17, 0
    %p56 = por %p54, %p55
    %s58 = sadd.s32 %s57, 1
    %p61 = scmp.eq.s32.totalorder %s11, 3
    %p62 = scmp.ne.s32.totalorder %s57, %s59
    %p63 = scmp.eq.s32.totalorder %s11, 0
    %p64 = por %p62, %p63
    %p65 = scmp.ne.s32.totalorder %s57, %s59
    %p66 = scmp.eq.s32.totalorder %s16, 3
    %p67 = por %p65, %p66
    %p68 = scmp.ne.s32.totalorder %s59, %s60
    %p69 = scmp.eq.s32.totalorder %s16, 0
    %p70 = por %p68, %p69
    %p71 = scmp.ne.s32.totalorder %s59, %s60
    %p72 = scmp.eq.s32.totalorder %s17, 3
    %p73 = por %p71, %p72
    %p75 = scmp.ne.s32.totalorder %s60, %s74
    %p76 = scmp.eq.s32.totalorder %s17, 0
    %p77 = por %p75, %p76
    %s79 = sadd.s32 %s78, 1
    %p82 = scmp.eq.s32.totalorder %s11, 3
    %p83 = scmp.ne.s32.totalorder %s78, %s80
    %p84 = scmp.eq.s32.totalorder %s11, 0
    %p85 = por %p83, %p84
    %p86 = scmp.ne.s32.totalorder %s78, %s80
    %p87 = scmp.eq.s32.totalorder %s16, 3
    %p88 = por %p86, %p87
    %p89 = scmp.ne.s32.totalorder %s80, %s81
    %p90 = scmp.eq.s32.totalorder %s16, 0
    %p91 = por %p89, %p90
    %p92 = scmp.ne.s32.totalorder %s80, %s81
    %p93 = scmp.eq.s32.totalorder %s17, 3
    %p94 = por %p92, %p93
    %p96 = scmp.ne.s32.totalorder %s81, %s95
    %p97 = scmp.eq.s32.totalorder %s17, 0
    %p98 = por %p96, %p97
    %s100 = sadd.s32 %s99, 1
    %p103 = scmp.eq.s32.totalorder %s11, 3
    %p104 = scmp.ne.s32.totalorder %s99, %s101
    %p105 = scmp.eq.s32.totalorder %s11, 0
    %p106 = por %p104, %p105
    %p107 = scmp.ne.s32.totalorder %s99, %s101
    %p108 = scmp.eq.s32.totalorder %s16, 3
    %p109 = por %p107, %p108
    %p110 = scmp.ne.s32.totalorder %s101, %s102
    %p111 = scmp.eq.s32.totalorder %s16, 0
    %p112 = por %p110, %p111
    %p113 = scmp.ne.s32.totalorder %s101, %s102
    %p114 = scmp.eq.s32.totalorder %s17, 3
    %p115 = por %p113, %p114
    %p117 = scmp.ne.s32.totalorder %s102, %s116
    %p118 = scmp.eq.s32.totalorder %s17, 0
    %p119 = por %p117, %p118
    %s121 = sadd.s32 %s120, 1
    %p124 = scmp.eq.s32.totalorder %s11, 3
    %p125 = scmp.ne.s32.totalorder %s120, %s122
    %p126 = scmp.eq.s32.totalorder %s11, 0
    %p127 = por %p125, %p126
    %p128 = scmp.ne.s32.totalorder %s120, %s122
    %p129 = scmp.eq.s32.totalorder %s16, 3
    %p130 = por %p128, %p129
    %p131 = scmp.ne.s32.totalorder %s122, %s123
    %p132 = scmp.eq.s32.totalorder %s16, 0
    %p133 = por %p131, %p132
    %p134 = scmp.ne.s32.totalorder %s122, %s123
    %p135 = scmp.eq.s32.totalorder %s17, 3
    %p136 = por %p134, %p135
    %p138 = scmp.ne.s32.totalorder %s123, %s137
    %p139 = scmp.eq.s32.totalorder %s17, 0
    %p140 = por %p138, %p139
    %s141 = ssub.s32 %s18, %s30
    %s142 = ssub.s32 %s19, %s26
    %s143 = sor.u32 %s141, %s142
    %p144 = scmp.eq.s32.totalorder %s143, 0
    %s146 = sadd.s32 %s145, 1
    %s147 = scalar_select %p144, %s145, %s146
    %p150 = pneg %p144
    %p151 = scmp.eq.s32.totalorder %s11, 3
    %p152 = por %p150, %p151
    %p153 = scmp.ne.s32.totalorder %s145, %s148
    %p154 = scmp.eq.s32.totalorder %s11, 0
    %p155 = por %p153, %p154
    %p156 = scmp.ne.s32.totalorder %s145, %s148
    %p157 = scmp.eq.s32.totalorder %s16, 3
    %p158 = por %p156, %p157
    %p159 = scmp.ne.s32.totalorder %s148, %s149
    %p160 = scmp.eq.s32.totalorder %s16, 0
    %p161 = por %p159, %p160
    %p162 = scmp.ne.s32.totalorder %s148, %s149
    %p163 = scmp.eq.s32.totalorder %s17, 3
    %p164 = por %p162, %p163
    %p166 = scmp.ne.s32.totalorder %s149, %s165
    %p167 = scmp.eq.s32.totalorder %s17, 0
    %p168 = por %p166, %p167
    %p169 = scmp.le.s32.totalorder 1, %s11
    %p170 = scmp.lt.s32.totalorder %s11, 5
    %p171 = pnand %p169, %p170
    %p172 = pneg %p171
    // Predicated region
    $region9: #{fused_mbconv_forward.1} parent=5 // pred_check
      _
    $region10: #{fused_mbconv_forward.1} parent=5 // pred_check_branch
      %174 = sbr.rel (%p171) target = $region12
    $region11: #{fused_mbconv_forward.1} parent=5 // pred_region
      %s175 = ssub.s32 %s11, 1
      // Predicated region
      $region13: #{fused_mbconv_forward.1} parent=11 // pred_check
        %p176 = pneg %p70
      $region14: #{fused_mbconv_forward.1} parent=11 // pred_check_branch
        %178 = sbr.rel (%p176) target = $region16
      $region15: #{fused_mbconv_forward.1} parent=11 // pred_region
        _
      $region16: #{fused_mbconv_forward.1} parent=11 // pred_fallthru
        _
      // Predicated region
      $region17: #{fused_mbconv_forward.1} parent=11 // pred_check
        %p179 = pneg %p91
      $region18: #{fused_mbconv_forward.1} parent=11 // pred_check_branch
        %181 = sbr.rel (%p179) target = $region20
      $region19: #{fused_mbconv_forward.1} parent=11 // pred_region
        _
      $region20: #{fused_mbconv_forward.1} parent=11 // pred_fallthru
        _
      // Predicated region
      $region21: #{fused_mbconv_forward.1} parent=11 // pred_check
        %p182 = pneg %p112
      $region22: #{fused_mbconv_forward.1} parent=11 // pred_check_branch
        %184 = sbr.rel (%p182) target = $region24
      $region23: #{fused_mbconv_forward.1} parent=11 // pred_region
        _
      $region24: #{fused_mbconv_forward.1} parent=11 // pred_fallthru
        _
      // Predicated region
      $region25: #{fused_mbconv_forward.1} parent=11 // pred_check
        %p185 = pneg %p133
      $region26: #{fused_mbconv_forward.1} parent=11 // pred_check_branch
        %187 = sbr.rel (%p185) target = $region28
      $region27: #{fused_mbconv_forward.1} parent=11 // pred_region
        _
      $region28: #{fused_mbconv_forward.1} parent=11 // pred_fallthru
        _
    $region12: #{fused_mbconv_forward.1} parent=5 // pred_fallthru
      _
    %p188 = scmp.lt.s32.totalorder %s11, 4
    // Predicated region
    $region29: #{fused_mbconv_forward.1} parent=5 // pred_check
      %p189 = pneg %p188
    $region30: #{fused_mbconv_forward.1} parent=5 // pred_check_branch
      %191 = sbr.rel (%p189) target = $region32
    $region31: #{fused_mbconv_forward.1} parent=5 // pred_region
      // Predicated region
      $region33: #{fused_mbconv_forward.1} parent=31 // pred_check
        %p192 = pneg %p43
      $region34: #{fused_mbconv_forward.1} parent=31 // pred_check_branch
        %194 = sbr.rel (%p192) target = $region36
      $region35: #{fused_mbconv_forward.1} parent=31 // pred_region
        %p195 = scmp.lt.s32.totalorder %s18, 1
        %s196 = scalar_select %p195, %s18, 1
        %s197 = smul.addr %s196, 54
        %s198 = smul.addr %s197, 4
        %s199 = scalar_lea.vmem %s0, %s198
      $region36: #{fused_mbconv_forward.1} parent=31 // pred_fallthru
        _
    $region32: #{fused_mbconv_forward.1} parent=5 // pred_fallthru
      _
    %p200 = scmp.le.s32.totalorder 1, %s11
    %p201 = scmp.lt.s32.totalorder %s11, 5
    %p202 = pnand %p200, %p201
    %p203 = pneg %p202
    // Predicated region
    $region37: #{fused_mbconv_forward.1} parent=5 // pred_check
      _
    $region38: #{fused_mbconv_forward.1} parent=5 // pred_check_branch
      %205 = sbr.rel (%p202) target = $region40
    $region39: #{fused_mbconv_forward.1} parent=5 // pred_region
      %s206 = ssub.s32 %s11, 1
      %p207 = scmp.lt.s32.totalorder %s20, 1
      %s208 = scalar_select %p207, %s20, 1
      %s209 = smul.addr %s208, 54
      %s210 = smul.addr %s209, 4
      %s211 = scalar_lea.vmem %s0, %s210
      %p212 = pneg %p49
      %p213 = pneg %p46
      %p214 = pneg %p70
      %p215 = pneg %p67
      %p216 = pneg %p91
      %p217 = pneg %p88
      %p218 = pneg %p112
      %p219 = pneg %p109
      %p220 = pneg %p133
      %p221 = pneg %p130
      %p222 = pneg %p161
      %p223 = pneg %p158
      %s224 = smul.u32 8, %s21
      %p225 = scmp.lt.s32.totalorder %s20, 1
      %s226 = scalar_select %p225, %s20, 1
      %p227 = scmp.lt.s32.totalorder %s224, 15
      %s228 = scalar_select %p227, %s224, 15
      %s229 = smul.addr %s228, 2
      %s230 = smul.addr %s226, 32
      %s231 = sadd.s32 %s229, %s230
      %s232 = smul.addr %s231, 8
      %s233 = scalar_lea.vmem %s5, %s232
      %p234 = scmp.lt.s32.totalorder %s20, 1
      %s235 = scalar_select %p234, %s20, 1
      %s236 = smul.addr %s235, 54
      %s237 = smul.addr %s236, 4
      %s238 = scalar_lea.vmem %s0, %s237
      %s239 = smul.u32 8, %s21
      %p240 = scmp.lt.s32.totalorder %s20, 1
      %s241 = scalar_select %p240, %s20, 1
      %p242 = scmp.lt.s32.totalorder %s239, 15
      %s243 = scalar_select %p242, %s239, 15
      %s244 = smul.addr %s243, 2
      %s245 = smul.addr %s241, 32
      %s246 = sadd.s32 %s244, %s245
      %s247 = smul.addr %s246, 8
      %s248 = scalar_lea.vmem %s5, %s247
      %s249 = smul.u32 8, %s21
      %s251 = smul.u32 %s21, 8
      %s252 = smul.u32 %s251, 3
      %s253 = smul.addr %s252, 4
      %s254 = scalar_lea.vmem %s238, %s253
      %v255 = vld [vmem:[%s254] sm:$0xf]
      %v256 = vld [vmem:[%s254 + $0x4] sm:$0xf]
      %v257 = vld [vmem:[%s254 + $0x8] sm:$0x1]
      %v258 = vld [vmem:[%s254 + $0xc] sm:$0xf]
      %v259 = vld [vmem:[%s254 + $0x10] sm:$0xf]
      %v260 = vld [vmem:[%s254 + $0x14] sm:$0x1]
      %v261 = vld [vmem:[%s254 + $0x18] sm:$0xf]
      %v262 = vld [vmem:[%s254 + $0x1c] sm:$0xf]
      %v263 = vld [vmem:[%s254 + $0x20] sm:$0x1]
      %v264 = vld [vmem:[%s254 + $0x24] sm:$0xf]
      %v265 = vld [vmem:[%s254 + $0x28] sm:$0xf]
      %v266 = vld [vmem:[%s254 + $0x2c] sm:$0x1]
      %v267 = vld [vmem:[%s254 + $0x30] sm:$0xf]
      %v268 = vld [vmem:[%s254 + $0x34] sm:$0xf]
      %v269 = vld [vmem:[%s254 + $0x38] sm:$0x1]
      %v270 = vld [vmem:[%s254 + $0x3c] sm:$0xf]
      %v271 = vld [vmem:[%s254 + $0x40] sm:$0xf]
      %v272 = vld [vmem:[%s254 + $0x44] sm:$0x1]
      %v273 = vld [vmem:[%s254 + $0x48] sm:$0xf]
      %v274 = vld [vmem:[%s254 + $0x4c] sm:$0xf]
      %v275 = vld [vmem:[%s254 + $0x50] sm:$0x1]
      %v276 = vld [vmem:[%s254 + $0x54] sm:$0xf]
      %v277 = vld [vmem:[%s254 + $0x58] sm:$0xf]
      %v278 = vld [vmem:[%s254 + $0x5c] sm:$0x1]
      %v279 = vld [vmem:[%s254 + $0x60] sm:$0xf]
      %v280 = vld [vmem:[%s254 + $0x64] sm:$0xf]
      %v281 = vld [vmem:[%s254 + $0x68] sm:$0x1]
      %v282 = vld [vmem:[%s254 + $0x6c] sm:$0xf]
      %v283 = vld [vmem:[%s254 + $0x70] sm:$0xf]
      %v284 = vld [vmem:[%s254 + $0x74] sm:$0x1]
      %v285 = vld [vmem:[%s1] sm:$0xf]
      %v286 = vld [vmem:[%s1 + $0x4] sm:$0xf]
      %vm287 = vsmask.f32 3328
      %vm288 = vsmask.f32 7440
      %vm289 = vmor %vm287, %vm288
      %v291 = vshrl.u32 %v255, 16
      %v293 = vrot.slane %v291, 4
      %v294 = vshll.u32 %v255, 16
      %v296 = vrot.slane %v294, 5
      %v297 = vor.u32 %v293, %v296
      %v298 = vrot.slane %v297, 4
      %v300 = vshll.u32 %v256, 16
      %v302 = vrot.slane %v300, 5
      %v303 = vsel %vm289, %v298, %v302
      %v304 = vshrl.u32 %v256, 16
      %v306 = vrot.slane %v304, 4
      %v307 = vor.u32 %v306, %v302
      %v308 = vrot.slane %v307, 4
      %v310 = vshll.u32 %v257, 16
      %v312 = vrot.slane %v310, 5
      %v313 = vsel %vm289, %v308, %v312
      %v315 = vshrl.u32 %v258, 16
      %v317 = vrot.slane %v315, 4
      %v318 = vshll.u32 %v258, 16
      %v320 = vrot.slane %v318, 5
      %v321 = vor.u32 %v317, %v320
      %v322 = vrot.slane %v321, 4
      %v324 = vshll.u32 %v259, 16
      %v326 = vrot.slane %v324, 5
      %v327 = vsel %vm289, %v322, %v326
      %v328 = vshrl.u32 %v259, 16
      %v330 = vrot.slane %v328, 4
      %v331 = vor.u32 %v330, %v326
      %v332 = vrot.slane %v331, 4
      %v334 = vshll.u32 %v260, 16
      %v336 = vrot.slane %v334, 5
      %v337 = vsel %vm289, %v332, %v336
      %v339 = vshrl.u32 %v261, 16
      %v341 = vrot.slane %v339, 4
      %v342 = vshll.u32 %v261, 16
      %v344 = vrot.slane %v342, 5
      %v345 = vor.u32 %v341, %v344
      %v346 = vrot.slane %v345, 4
      %v348 = vshll.u32 %v262, 16
      %v350 = vrot.slane %v348, 5
      %v351 = vsel %vm289, %v346, %v350
      %v352 = vshrl.u32 %v262, 16
      %v354 = vrot.slane %v352, 4
      %v355 = vor.u32 %v354, %v350
      %v356 = vrot.slane %v355, 4
      %v358 = vshll.u32 %v263, 16
      %v360 = vrot.slane %v358, 5
      %v361 = vsel %vm289, %v356, %v360
      %v363 = vshrl.u32 %v264, 16
      %v365 = vrot.slane %v363, 4
      %v366 = vshll.u32 %v264, 16
      %v368 = vrot.slane %v366, 5
      %v369 = vor.u32 %v365, %v368
      %v370 = vrot.slane %v369, 4
      %v372 = vshll.u32 %v265, 16
      %v374 = vrot.slane %v372, 5
      %v375 = vsel %vm289, %v370, %v374
      %v376 = vshrl.u32 %v265, 16
      %v378 = vrot.slane %v376, 4
      %v379 = vor.u32 %v378, %v374
      %v380 = vrot.slane %v379, 4
      %v382 = vshll.u32 %v266, 16
      %v384 = vrot.slane %v382, 5
      %v385 = vsel %vm289, %v380, %v384
      %v387 = vshrl.u32 %v267, 16
      %v389 = vrot.slane %v387, 4
      %v390 = vshll.u32 %v267, 16
      %v392 = vrot.slane %v390, 5
      %v393 = vor.u32 %v389, %v392
      %v394 = vrot.slane %v393, 4
      %v396 = vshll.u32 %v268, 16
      %v398 = vrot.slane %v396, 5
      %v399 = vsel %vm289, %v394, %v398
      %v400 = vshrl.u32 %v268, 16
      %v402 = vrot.slane %v400, 4
      %v403 = vor.u32 %v402, %v398
      %v404 = vrot.slane %v403, 4
      %v406 = vshll.u32 %v269, 16
      %v408 = vrot.slane %v406, 5
      %v409 = vsel %vm289, %v404, %v408
      %v411 = vshrl.u32 %v270, 16
      %v413 = vrot.slane %v411, 4
      %v414 = vshll.u32 %v270, 16
      %v416 = vrot.slane %v414, 5
      %v417 = vor.u32 %v413, %v416
      %v418 = vrot.slane %v417, 4
      %v420 = vshll.u32 %v271, 16
      %v422 = vrot.slane %v420, 5
      %v423 = vsel %vm289, %v418, %v422
      %v424 = vshrl.u32 %v271, 16
      %v426 = vrot.slane %v424, 4
      %v427 = vor.u32 %v426, %v422
      %v428 = vrot.slane %v427, 4
      %v430 = vshll.u32 %v272, 16
      %v432 = vrot.slane %v430, 5
      %v433 = vsel %vm289, %v428, %v432
      %v435 = vshrl.u32 %v273, 16
      %v437 = vrot.slane %v435, 4
      %v438 = vshll.u32 %v273, 16
      %v440 = vrot.slane %v438, 5
      %v441 = vor.u32 %v437, %v440
      %v442 = vrot.slane %v441, 4
      %v444 = vshll.u32 %v274, 16
      %v446 = vrot.slane %v444, 5
      %v447 = vsel %vm289, %v442, %v446
      %v448 = vshrl.u32 %v274, 16
      %v450 = vrot.slane %v448, 4
      %v451 = vor.u32 %v450, %v446
      %v452 = vrot.slane %v451, 4
      %v454 = vshll.u32 %v275, 16
      %v456 = vrot.slane %v454, 5
      %v457 = vsel %vm289, %v452, %v456
      %v459 = vshrl.u32 %v276, 16
      %v461 = vrot.slane %v459, 4
      %v462 = vshll.u32 %v276, 16
      %v464 = vrot.slane %v462, 5
      %v465 = vor.u32 %v461, %v464
      %v466 = vrot.slane %v465, 4
      %v468 = vshll.u32 %v277, 16
      %v470 = vrot.slane %v468, 5
      %v471 = vsel %vm289, %v466, %v470
      %v472 = vshrl.u32 %v277, 16
      %v474 = vrot.slane %v472, 4
      %v475 = vor.u32 %v474, %v470
      %v476 = vrot.slane %v475, 4
      %v478 = vshll.u32 %v278, 16
      %v480 = vrot.slane %v478, 5
      %v481 = vsel %vm289, %v476, %v480
      %s482 = scalar_lea.vmem %s1, 8
      %v483 = vld [vmem:[%s482] sm:$0xf]
      %v484 = vld [vmem:[%s482 + $0x4] sm:$0xf]
      %v485 = vunpack.c.l.b16 %v303
      %v486 = vunpack.c.l.b16 %v313
      %v487 = vunpack.c.l.b16 %v327
      %v488 = vunpack.c.l.b16 %v337
      %v489 = vunpack.c.l.b16 %v351
      %v490 = vunpack.c.l.b16 %v361
      %v491 = vunpack.c.l.b16 %v375
      %v492 = vunpack.c.l.b16 %v385
      %v493 = vunpack.c.l.b16 %v399
      %v494 = vunpack.c.l.b16 %v409
      %v495 = vunpack.c.l.b16 %v423
      %v496 = vunpack.c.l.b16 %v433
      %v497 = vunpack.c.l.b16 %v447
      %v498 = vunpack.c.l.b16 %v457
      %v499 = vunpack.c.l.b16 %v471
      %v500 = vunpack.c.l.b16 %v481
      %v501 = vpack.c.b16 %v486, %v485
      %v502 = vpack.c.b16 %v488, %v487
      %v503 = vpack.c.b16 %v490, %v489
      %v504 = vpack.c.b16 %v492, %v491
      %v505 = vpack.c.b16 %v494, %v493
      %v506 = vpack.c.b16 %v496, %v495
      %v507 = vpack.c.b16 %v498, %v497
      %v508 = vpack.c.b16 %v500, %v499
      %v511 = vunpack.c.l.b16 %v483
      %v512 = vunpack.c.l.b16 %v484
      %v513 = vpack.c.b16 %v512, %v511
      %vm515 = vcmask 130048
      %v517 = vsel %vm515, %v501, 0
      %v520 = vsel %vm515, %v502, 0
      %v523 = vsel %vm515, %v503, 0
      %v526 = vsel %vm515, %v504, 0
      %v529 = vsel %vm515, %v505, 0
      %v532 = vsel %vm515, %v506, 0
      %v535 = vsel %vm515, %v507, 0
      %v538 = vsel %vm515, %v508, 0
      %540 = vmatprep.subr.bf16.mxu0 0
      %541 = vmatpush1.bf16.msra.mxu0 %v513
      %542 = vmatprep.subr.bf16.mxu0 0
      %543 = vmatpush1.bf16.msra.mxu0 0
      %544 = vmatprep.subr.bf16.mxu0 0
      %545 = vmatpush1.bf16.msra.mxu0 0
      %546 = vmatprep.subr.bf16.mxu0 0
      %547 = vmatpush1.bf16.msra.mxu0 0
      %548 = vmatprep.subr.bf16.mxu0 0
      %549 = vmatpush1.bf16.msra.mxu0 0
      %550 = vmatprep.subr.bf16.mxu0 0
      %551 = vmatpush1.bf16.msra.mxu0 0
      %552 = vmatprep.subr.bf16.mxu0 0
      %553 = vmatpush1.bf16.msra.mxu0 0
      %554 = vmatprep.subr.bf16.mxu0 0
      %555 = vmatpush1.bf16.msra.mxu0 0
      %556 = vmatprep.subr.bf16.mxu0 0
      %557 = vmatpush1.bf16.msra.mxu0 0
      %558 = vmatprep.subr.bf16.mxu0 0
      %559 = vmatpush1.bf16.msra.mxu0 0
      %560 = vmatprep.subr.bf16.mxu0 0
      %561 = vmatpush1.bf16.msra.mxu0 0
      %562 = vmatprep.subr.bf16.mxu0 0
      %563 = vmatpush1.bf16.msra.mxu0 0
      %564 = vmatprep.subr.bf16.mxu0 0
      %565 = vmatpush1.bf16.msra.mxu0 0
      %566 = vmatprep.subr.bf16.mxu0 0
      %567 = vmatpush1.bf16.msra.mxu0 0
      %568 = vmatprep.subr.bf16.mxu0 0
      %569 = vmatpush1.bf16.msra.mxu0 0
      %570 = vmatprep.subr.bf16.mxu0 0
      %571 = vmatpush1.bf16.msra.mxu0 0
      %572 = vmatprep.mubr.bf16.mxu0 0
      %573 = vmatmul.mubr.bf16.gmra.mrb[0].mxu0 %v517
      %v574 = vpop.f32.mrb[0].mxu0
      %v575 = vadd.f32 0.0, %v574
      %v576 = vpop.f32.mrb[0].mxu0
      %v577 = vpop.f32.mrb[0].mxu0
      %v578 = vadd.f32 0.0, %v577
      %v579 = vpop.f32.mrb[0].mxu0
      %580 = vmatprep.mubr.bf16.mxu0 0
      %581 = vmatmul.mubr.bf16.gmra.mrb[0].mxu0 %v520
      %v582 = vpop.f32.mrb[0].mxu0
      %v583 = vadd.f32 0.0, %v582
      %v584 = vpop.f32.mrb[0].mxu0
      %v585 = vpop.f32.mrb[0].mxu0
      %v586 = vadd.f32 0.0, %v585
      %v587 = vpop.f32.mrb[0].mxu0
      %588 = vmatprep.mubr.bf16.mxu0 0
      %589 = vmatmul.mubr.bf16.gmra.mrb[0].mxu0 %v523
      %v590 = vpop.f32.mrb[0].mxu0
      %v591 = vadd.f32 0.0, %v590
      %v592 = vpop.f32.mrb[0].mxu0
      %v593 = vpop.f32.mrb[0].mxu0
      %v594 = vadd.f32 0.0, %v593
      %v595 = vpop.f32.mrb[0].mxu0
      %596 = vmatprep.mubr.bf16.mxu0 0
      %597 = vmatmul.mubr.bf16.gmra.mrb[0].mxu0 %v526
      %v598 = vpop.f32.mrb[0].mxu0
      %v599 = vadd.f32 0.0, %v598
      %v600 = vpop.f32.mrb[0].mxu0
      %v601 = vpop.f32.mrb[0].mxu0
      %v602 = vadd.f32 0.0, %v601
      %v603 = vpop.f32.mrb[0].mxu0
      %604 = vmatprep.mubr.bf16.mxu0 0
      %605 = vmatmul.mubr.bf16.gmra.mrb[0].mxu0 %v529
      %v606 = vpop.f32.mrb[0].mxu0
      %v607 = vadd.f32 0.0, %v606
      %v608 = vpop.f32.mrb[0].mxu0
      %v609 = vpop.f32.mrb[0].mxu0
      %v610 = vadd.f32 0.0, %v609
      %v611 = vpop.f32.mrb[0].mxu0
      %612 = vmatprep.mubr.bf16.mxu0 0
      %613 = vmatmul.mubr.bf16.gmra.mrb[0].mxu0 %v532
      %v614 = vpop.f32.mrb[0].mxu0
      %v615 = vadd.f32 0.0, %v614
      %v616 = vpop.f32.mrb[0].mxu0
      %v617 = vpop.f32.mrb[0].mxu0
      %v618 = vadd.f32 0.0, %v617
      %v619 = vpop.f32.mrb[0].mxu0
      %620 = vmatprep.mubr.bf16.mxu0 0
      %621 = vmatmul.mubr.bf16.gmra.mrb[0].mxu0 %v535
      %v622 = vpop.f32.mrb[0].mxu0
      %v623 = vadd.f32 0.0, %v622
      %v624 = vpop.f32.mrb[0].mxu0
      %v625 = vpop.f32.mrb[0].mxu0
      %v626 = vadd.f32 0.0, %v625
      %v627 = vpop.f32.mrb[0].mxu0
      %628 = vmatprep.mubr.bf16.mxu0 0
      %629 = vmatmul.mubr.bf16.gmra.mrb[0].mxu0 %v538
      %v630 = vpop.f32.mrb[0].mxu0
      %v631 = vadd.f32 0.0, %v630
      %v632 = vpop.f32.mrb[0].mxu0
      %v633 = vpop.f32.mrb[0].mxu0
      %v634 = vadd.f32 0.0, %v633
      %v635 = vpop.f32.mrb[0].mxu0
      %636 = vdwg.mxu0
      %v653 = vunpack.c.l.b16 %v255
      %v654 = vunpack.c.l.b16 %v256
      %v655 = vunpack.c.l.b16 %v258
      %v656 = vunpack.c.l.b16 %v259
      %v657 = vunpack.c.l.b16 %v261
      %v658 = vunpack.c.l.b16 %v262
      %v659 = vunpack.c.l.b16 %v264
      %v660 = vunpack.c.l.b16 %v265
      %v661 = vunpack.c.l.b16 %v267
      %v662 = vunpack.c.l.b16 %v268
      %v663 = vunpack.c.l.b16 %v270
      %v664 = vunpack.c.l.b16 %v271
      %v665 = vunpack.c.l.b16 %v273
      %v666 = vunpack.c.l.b16 %v274
      %v667 = vunpack.c.l.b16 %v276
      %v668 = vunpack.c.l.b16 %v277
      %v669 = vpack.c.b16 %v654, %v653
      %v670 = vpack.c.b16 %v656, %v655
      %v671 = vpack.c.b16 %v658, %v657
      %v672 = vpack.c.b16 %v660, %v659
      %v673 = vpack.c.b16 %v662, %v661
      %v674 = vpack.c.b16 %v664, %v663
      %v675 = vpack.c.b16 %v666, %v665
      %v676 = vpack.c.b16 %v668, %v667
      %v679 = vunpack.c.l.b16 %v285
      %v680 = vunpack.c.l.b16 %v286
      %v681 = vpack.c.b16 %v680, %v679
      %v684 = vsel %vm515, %v669, 0
      %v687 = vsel %vm515, %v670, 0
      %v690 = vsel %vm515, %v671, 0
      %v693 = vsel %vm515, %v672, 0
      %v696 = vsel %vm515, %v673, 0
      %v699 = vsel %vm515, %v674, 0
      %v702 = vsel %vm515, %v675, 0
      %v705 = vsel %vm515, %v676, 0
      %707 = vmatprep.subr.bf16.mxu0 0
      %708 = vmatpush1.bf16.msra.mxu0 %v681
      %709 = vmatprep.subr.bf16.mxu0 0
      %710 = vmatpush1.bf16.msra.mxu0 0
      %711 = vmatprep.subr.bf16.mxu0 0
      %712 = vmatpush1.bf16.msra.mxu0 0
      %713 = vmatprep.subr.bf16.mxu0 0
      %714 = vmatpush1.bf16.msra.mxu0 0
      %715 = vmatprep.subr.bf16.mxu0 0
      %716 = vmatpush1.bf16.msra.mxu0 0
      %717 = vmatprep.subr.bf16.mxu0 0
      %718 = vmatpush1.bf16.msra.mxu0 0
      %719 = vmatprep.subr.bf16.mxu0 0
      %720 = vmatpush1.bf16.msra.mxu0 0
      %721 = vmatprep.subr.bf16.mxu0 0
      %722 = vmatpush1.bf16.msra.mxu0 0
      %723 = vmatprep.subr.bf16.mxu0 0
      %724 = vmatpush1.bf16.msra.mxu0 0
      %725 = vmatprep.subr.bf16.mxu0 0
      %726 = vmatpush1.bf16.msra.mxu0 0
      %727 = vmatprep.subr.bf16.mxu0 0
      %728 = vmatpush1.bf16.msra.mxu0 0
      %729 = vmatprep.subr.bf16.mxu0 0
      %730 = vmatpush1.bf16.msra.mxu0 0
      %731 = vmatprep.subr.bf16.mxu0 0
      %732 = vmatpush1.bf16.msra.mxu0 0
      %733 = vmatprep.subr.bf16.mxu0 0
      %734 = vmatpush1.bf16.msra.mxu0 0
      %735 = vmatprep.subr.bf16.mxu0 0
      %736 = vmatpush1.bf16.msra.mxu0 0
      %737 = vmatprep.subr.bf16.mxu0 0
      %738 = vmatpush1.bf16.msra.mxu0 0
      %739 = vmatprep.mubr.bf16.mxu0 0
      %740 = vmatmul.mubr.bf16.gmra.mrb[0].mxu0 %v684
      %v741 = vpop.f32.mrb[0].mxu0
      %v742 = vadd.f32 %v575, %v741
      %v743 = vpop.f32.mrb[0].mxu0
      %v744 = vpop.f32.mrb[0].mxu0
      %v745 = vadd.f32 %v578, %v744
      %v746 = vpop.f32.mrb[0].mxu0
      %747 = vmatprep.mubr.bf16.mxu0 0
      %748 = vmatmul.mubr.bf16.gmra.mrb[0].mxu0 %v687
      %v749 = vpop.f32.mrb[0].mxu0
      %v750 = vadd.f32 %v583, %v749
      %v751 = vpop.f32.mrb[0].mxu0
      %v752 = vpop.f32.mrb[0].mxu0
      %v753 = vadd.f32 %v586, %v752
      %v754 = vpop.f32.mrb[0].mxu0
      %755 = vmatprep.mubr.bf16.mxu0 0
      %756 = vmatmul.mubr.bf16.gmra.mrb[0].mxu0 %v690
      %v757 = vpop.f32.mrb[0].mxu0
      %v758 = vadd.f32 %v591, %v757
      %v759 = vpop.f32.mrb[0].mxu0
      %v760 = vpop.f32.mrb[0].mxu0
      %v761 = vadd.f32 %v594, %v760
      %v762 = vpop.f32.mrb[0].mxu0
      %763 = vmatprep.mubr.bf16.mxu0 0
      %764 = vmatmul.mubr.bf16.gmra.mrb[0].mxu0 %v693
      %v765 = vpop.f32.mrb[0].mxu0
      %v766 = vadd.f32 %v599, %v765
      %v767 = vpop.f32.mrb[0].mxu0
      %v768 = vpop.f32.mrb[0].mxu0
      %v769 = vadd.f32 %v602, %v768
      %v770 = vpop.f32.mrb[0].mxu0
      %771 = vmatprep.mubr.bf16.mxu0 0
      %772 = vmatmul.mubr.bf16.gmra.mrb[0].mxu0 %v696
      %v773 = vpop.f32.mrb[0].mxu0
      %v774 = vadd.f32 %v607, %v773
      %v775 = vpop.f32.mrb[0].mxu0
      %v776 = vpop.f32.mrb[0].mxu0
      %v777 = vadd.f32 %v610, %v776
      %v778 = vpop.f32.mrb[0].mxu0
      %779 = vmatprep.mubr.bf16.mxu0 0
      %780 = vmatmul.mubr.bf16.gmra.mrb[0].mxu0 %v699
      %v781 = vpop.f32.mrb[0].mxu0
      %v782 = vadd.f32 %v615, %v781
      %v783 = vpop.f32.mrb[0].mxu0
      %v784 = vpop.f32.mrb[0].mxu0
      %v785 = vadd.f32 %v618, %v784
      %v786 = vpop.f32.mrb[0].mxu0
      %787 = vmatprep.mubr.bf16.mxu0 0
      %788 = vmatmul.mubr.bf16.gmra.mrb[0].mxu0 %v702
      %v789 = vpop.f32.mrb[0].mxu0
      %v790 = vadd.f32 %v623, %v789
      %v791 = vpop.f32.mrb[0].mxu0
      %v792 = vpop.f32.mrb[0].mxu0
      %v793 = vadd.f32 %v626, %v792
      %v794 = vpop.f32.mrb[0].mxu0
      %795 = vmatprep.mubr.bf16.mxu0 0
      %796 = vmatmul.mubr.bf16.gmra.mrb[0].mxu0 %v705
      %v797 = vpop.f32.mrb[0].mxu0
      %v798 = vadd.f32 %v631, %v797
      %v799 = vpop.f32.mrb[0].mxu0
      %v800 = vpop.f32.mrb[0].mxu0
      %v801 = vadd.f32 %v634, %v800
      %v802 = vpop.f32.mrb[0].mxu0
      %803 = vdwg.mxu0
      %vm812 = vcmask 1042432
      %vm813 = vcmask 1046532
      %vm814 = vmor %vm812, %vm813
      %v815 = vrot.slane %v255, 5
      %v816 = vrot.slane %v815, 4
      %v817 = vrot.slane %v256, 5
      %v818 = vsel %vm814, %v816, %v817
      %v819 = vrot.slane %v817, 4
      %v820 = vrot.slane %v257, 5
      %v821 = vsel %vm814, %v819, %v820
      %v822 = vrot.slane %v258, 5
      %v823 = vrot.slane %v822, 4
      %v824 = vrot.slane %v259, 5
      %v825 = vsel %vm814, %v823, %v824
      %v826 = vrot.slane %v824, 4
      %v827 = vrot.slane %v260, 5
      %v828 = vsel %vm814, %v826, %v827
      %v829 = vrot.slane %v261, 5
      %v830 = vrot.slane %v829, 4
      %v831 = vrot.slane %v262, 5
      %v832 = vsel %vm814, %v830, %v831
      %v833 = vrot.slane %v831, 4
      %v834 = vrot.slane %v263, 5
      %v835 = vsel %vm814, %v833, %v834
      %v836 = vrot.slane %v264, 5
      %v837 = vrot.slane %v836, 4
      %v838 = vrot.slane %v265, 5
      %v839 = vsel %vm814, %v837, %v838
      %v840 = vrot.slane %v838, 4
      %v841 = vrot.slane %v266, 5
      %v842 = vsel %vm814, %v840, %v841
      %v843 = vrot.slane %v267, 5
      %v844 = vrot.slane %v843, 4
      %v845 = vrot.slane %v268, 5
      %v846 = vsel %vm814, %v844, %v845
      %v847 = vrot.slane %v845, 4
      %v848 = vrot.slane %v269, 5
      %v849 = vsel %vm814, %v847, %v848
      %v850 = vrot.slane %v270, 5
      %v851 = vrot.slane %v850, 4
      %v852 = vrot.slane %v271, 5
      %v853 = vsel %vm814, %v851, %v852
      %v854 = vrot.slane %v852, 4
      %v855 = vrot.slane %v272, 5
      %v856 = vsel %vm814, %v854, %v855
      %v857 = vrot.slane %v273, 5
      %v858 = vrot.slane %v857, 4
      %v859 = vrot.slane %v274, 5
      %v860 = vsel %vm814, %v858, %v859
      %v861 = vrot.slane %v859, 4
      %v862 = vrot.slane %v275, 5
      %v863 = vsel %vm814, %v861, %v862
      %v864 = vrot.slane %v276, 5
      %v865 = vrot.slane %v864, 4
      %v866 = vrot.slane %v277, 5
      %v867 = vsel %vm814, %v865, %v866
      %v868 = vrot.slane %v866, 4
      %v869 = vrot.slane %v278, 5
      %v870 = vsel %vm814, %v868, %v869
      %s871 = scalar_lea.vmem %s1, 16
      %v872 = vld [vmem:[%s871] sm:$0xf]
      %v873 = vld [vmem:[%s871 + $0x4] sm:$0xf]
      %v874 = vunpack.c.l.b16 %v818
      %v875 = vunpack.c.l.b16 %v821
      %v876 = vunpack.c.l.b16 %v825
      %v877 = vunpack.c.l.b16 %v828
      %v878 = vunpack.c.l.b16 %v832
      %v879 = vunpack.c.l.b16 %v835
      %v880 = vunpack.c.l.b16 %v839
      %v881 = vunpack.c.l.b16 %v842
      %v882 = vunpack.c.l.b16 %v846
      %v883 = vunpack.c.l.b16 %v849
      %v884 = vunpack.c.l.b16 %v853
      %v885 = vunpack.c.l.b16 %v856
      %v886 = vunpack.c.l.b16 %v860
      %v887 = vunpack.c.l.b16 %v863
      %v888 = vunpack.c.l.b16 %v867
      %v889 = vunpack.c.l.b16 %v870
      %v890 = vpack.c.b16 %v875, %v874
      %v891 = vpack.c.b16 %v877, %v876
      %v892 = vpack.c.b16 %v879, %v878
      %v893 = vpack.c.b16 %v881, %v880
      %v894 = vpack.c.b16 %v883, %v882
      %v895 = vpack.c.b16 %v885, %v884
      %v896 = vpack.c.b16 %v887, %v886
      %v897 = vpack.c.b16 %v889, %v888
      %v900 = vunpack.c.l.b16 %v872
      %v901 = vunpack.c.l.b16 %v873
      %v902 = vpack.c.b16 %v901, %v900
      %v905 = vsel %vm515, %v890, 0
      %v908 = vsel %vm515, %v891, 0
      %v911 = vsel %vm515, %v892, 0
      %v914 = vsel %vm515, %v893, 0
      %v917 = vsel %vm515, %v894, 0
      %v920 = vsel %vm515, %v895, 0
      %v923 = vsel %vm515, %v896, 0
      %v926 = vsel %vm515, %v897, 0
      %928 = vmatprep.subr.bf16.mxu0 0
      %929 = vmatpush1.bf16.msra.mxu0 %v902
      %930 = vmatprep.subr.bf16.mxu0 0
      %931 = vmatpush1.bf16.msra.mxu0 0
      %932 = vmatprep.subr.bf16.mxu0 0
      %933 = vmatpush1.bf16.msra.mxu0 0
      %934 = vmatprep.subr.bf16.mxu0 0
      %935 = vmatpush1.bf16.msra.mxu0 0
      %936 = vmatprep.subr.bf16.mxu0 0
      %937 = vmatpush1.bf16.msra.mxu0 0
      %938 = vmatprep.subr.bf16.mxu0 0
      %939 = vmatpush1.bf16.msra.mxu0 0
      %940 = vmatprep.subr.bf16.mxu0 0
      %941 = vmatpush1.bf16.msra.mxu0 0
      %942 = vmatprep.subr.bf16.mxu0 0
      %943 = vmatpush1.bf16.msra.mxu0 0
      %944 = vmatprep.subr.bf16.mxu0 0
      %945 = vmatpush1.bf16.msra.mxu0 0
      %946 = vmatprep.subr.bf16.mxu0 0
      %947 = vmatpush1.bf16.msra.mxu0 0
      %948 = vmatprep.subr.bf16.mxu0 0
      %949 = vmatpush1.bf16.msra.mxu0 0
      %950 = vmatprep.subr.bf16.mxu0 0
      %951 = vmatpush1.bf16.msra.mxu0 0
      %952 = vmatprep.subr.bf16.mxu0 0
      %953 = vmatpush1.bf16.msra.mxu0 0
      %954 = vmatprep.subr.bf16.mxu0 0
      %955 = vmatpush1.bf16.msra.mxu0 0
      %956 = vmatprep.subr.bf16.mxu0 0
      %957 = vmatpush1.bf16.msra.mxu0 0
      %958 = vmatprep.subr.bf16.mxu0 0
      %959 = vmatpush1.bf16.msra.mxu0 0
      %960 = vmatprep.mubr.bf16.mxu0 0
      %961 = vmatmul.mubr.bf16.gmra.mrb[0].mxu0 %v905
      %v962 = vpop.f32.mrb[0].mxu0
      %v963 = vadd.f32 0.0, %v962
      %v964 = vpop.f32.mrb[0].mxu0
      %v965 = vpop.f32.mrb[0].mxu0
      %v966 = vadd.f32 0.0, %v965
      %v967 = vpop.f32.mrb[0].mxu0
      %968 = vmatprep.mubr.bf16.mxu0 0
      %969 = vmatmul.mubr.bf16.gmra.mrb[0].mxu0 %v908
      %v970 = vpop.f32.mrb[0].mxu0
      %v971 = vadd.f32 0.0, %v970
      %v972 = vpop.f32.mrb[0].mxu0
      %v973 = vpop.f32.mrb[0].mxu0
      %v974 = vadd.f32 0.0, %v973
      %v975 = vpop.f32.mrb[0].mxu0
      %976 = vmatprep.mubr.bf16.mxu0 0
      %977 = vmatmul.mubr.bf16.gmra.mrb[0].mxu0 %v911
      %v978 = vpop.f32.mrb[0].mxu0
      %v979 = vadd.f32 0.0, %v978
      %v980 = vpop.f32.mrb[0].mxu0
      %v981 = vpop.f32.mrb[0].mxu0
      %v982 = vadd.f32 0.0, %v981
      %v983 = vpop.f32.mrb[0].mxu0
      %984 = vmatprep.mubr.bf16.mxu0 0
      %985 = vmatmul.mubr.bf16.gmra.mrb[0].mxu0 %v914
      %v986 = vpop.f32.mrb[0].mxu0
      %v987 = vadd.f32 0.0, %v986
      %v988 = vpop.f32.mrb[0].mxu0
      %v989 = vpop.f32.mrb[0].mxu0
      %v990 = vadd.f32 0.0, %v989
      %v991 = vpop.f32.mrb[0].mxu0
      %992 = vmatprep.mubr.bf16.mxu0 0
      %993 = vmatmul.mubr.bf16.gmra.mrb[0].mxu0 %v917
      %v994 = vpop.f32.mrb[0].mxu0
      %v995 = vadd.f32 0.0, %v994
      %v996 = vpop.f32.mrb[0].mxu0
      %v997 = vpop.f32.mrb[0].mxu0
      %v998 = vadd.f32 0.0, %v997
      %v999 = vpop.f32.mrb[0].mxu0
      %1000 = vmatprep.mubr.bf16.mxu0 0
      %1001 = vmatmul.mubr.bf16.gmra.mrb[0].mxu0 %v920
      %v1002 = vpop.f32.mrb[0].mxu0
      %v1003 = vadd.f32 0.0, %v1002
      %v1004 = vpop.f32.mrb[0].mxu0
      %v1005 = vpop.f32.mrb[0].mxu0
      %v1006 = vadd.f32 0.0, %v1005
      %v1007 = vpop.f32.mrb[0].mxu0
      %1008 = vmatprep.mubr.bf16.mxu0 0
      %1009 = vmatmul.mubr.bf16.gmra.mrb[0].mxu0 %v923
      %v1010 = vpop.f32.mrb[0].mxu0
      %v1011 = vadd.f32 0.0, %v1010
      %v1012 = vpop.f32.mrb[0].mxu0
      %v1013 = vpop.f32.mrb[0].mxu0
      %v1014 = vadd.f32 0.0, %v1013
      %v1015 = vpop.f32.mrb[0].mxu0
      %1016 = vmatprep.mubr.bf16.mxu0 0
      %1017 = vmatmul.mubr.bf16.gmra.mrb[0].mxu0 %v926
      %v1018 = vpop.f32.mrb[0].mxu0
      %v1019 = vadd.f32 0.0, %v1018
      %v1020 = vpop.f32.mrb[0].mxu0
      %v1021 = vpop.f32.mrb[0].mxu0
      %v1022 = vadd.f32 0.0, %v1021
      %v1023 = vpop.f32.mrb[0].mxu0
      %1024 = vdwg.mxu0
      %v1025 = vadd.f32 %v742, %v963
      %v1026 = vadd.f32 %v745, %v966
      %v1027 = vadd.f32 %v750, %v971
      %v1028 = vadd.f32 %v753, %v974
      %v1029 = vadd.f32 %v758, %v979
      %v1030 = vadd.f32 %v761, %v982
      %v1031 = vadd.f32 %v766, %v987
      %v1032 = vadd.f32 %v769, %v990
      %v1033 = vadd.f32 %v774, %v995
      %v1034 = vadd.f32 %v777, %v998
      %v1035 = vadd.f32 %v782, %v1003
      %v1036 = vadd.f32 %v785, %v1006
      %v1037 = vadd.f32 %v790, %v1011
      %v1038 = vadd.f32 %v793, %v1014
      %v1039 = vadd.f32 %v798, %v1019
      %v1040 = vadd.f32 %v801, %v1022
      %s1041 = scalar_lea.vmem %s1, 24
      %v1042 = vld [vmem:[%s1041] sm:$0xf]
      %v1043 = vld [vmem:[%s1041 + $0x4] sm:$0xf]
      %v1046 = vunpack.c.l.b16 %v279
      %v1047 = vunpack.c.l.b16 %v280
      %v1048 = vpack.c.b16 %v1047, %v1046
      %v1051 = vunpack.c.l.b16 %v1042
      %v1052 = vunpack.c.l.b16 %v1043
      %v1053 = vpack.c.b16 %v1052, %v1051
      %v1056 = vsel %vm515, %v1048, 0
      %1058 = vmatprep.subr.bf16.mxu0 0
      %1059 = vmatpush1.bf16.msra.mxu0 %v1053
      %1060 = vmatprep.subr.bf16.mxu0 0
      %1061 = vmatpush1.bf16.msra.mxu0 0
      %1062 = vmatprep.subr.bf16.mxu0 0
      %1063 = vmatpush1.bf16.msra.mxu0 0
      %1064 = vmatprep.subr.bf16.mxu0 0
      %1065 = vmatpush1.bf16.msra.mxu0 0
      %1066 = vmatprep.subr.bf16.mxu0 0
      %1067 = vmatpush1.bf16.msra.mxu0 0
      %1068 = vmatprep.subr.bf16.mxu0 0
      %1069 = vmatpush1.bf16.msra.mxu0 0
      %1070 = vmatprep.subr.bf16.mxu0 0
      %1071 = vmatpush1.bf16.msra.mxu0 0
      %1072 = vmatprep.subr.bf16.mxu0 0
      %1073 = vmatpush1.bf16.msra.mxu0 0
      %1074 = vmatprep.subr.bf16.mxu0 0
      %1075 = vmatpush1.bf16.msra.mxu0 0
      %1076 = vmatprep.subr.bf16.mxu0 0
      %1077 = vmatpush1.bf16.msra.mxu0 0
      %1078 = vmatprep.subr.bf16.mxu0 0
      %1079 = vmatpush1.bf16.msra.mxu0 0
      %1080 = vmatprep.subr.bf16.mxu0 0
      %1081 = vmatpush1.bf16.msra.mxu0 0
      %1082 = vmatprep.subr.bf16.mxu0 0
      %1083 = vmatpush1.bf16.msra.mxu0 0
      %1084 = vmatprep.subr.bf16.mxu0 0
      %1085 = vmatpush1.bf16.msra.mxu0 0
      %1086 = vmatprep.subr.bf16.mxu0 0
      %1087 = vmatpush1.bf16.msra.mxu0 0
      %1088 = vmatprep.subr.bf16.mxu0 0
      %1089 = vmatpush1.bf16.msra.mxu0 0
      %1090 = vmatprep.mubr.bf16.mxu0 0
      %1091 = vmatmul.mubr.bf16.gmra.mrb[0].mxu0 %v687
      %v1092 = vpop.f32.mrb[0].mxu0
      %v1093 = vadd.f32 0.0, %v1092
      %v1094 = vpop.f32.mrb[0].mxu0
      %v1095 = vpop.f32.mrb[0].mxu0
      %v1096 = vadd.f32 0.0, %v1095
      %v1097 = vpop.f32.mrb[0].mxu0
      %1098 = vmatprep.mubr.bf16.mxu0 0
      %1099 = vmatmul.mubr.bf16.gmra.mrb[0].mxu0 %v690
      %v1100 = vpop.f32.mrb[0].mxu0
      %v1101 = vadd.f32 0.0, %v1100
      %v1102 = vpop.f32.mrb[0].mxu0
      %v1103 = vpop.f32.mrb[0].mxu0
      %v1104 = vadd.f32 0.0, %v1103
      %v1105 = vpop.f32.mrb[0].mxu0
      %1106 = vmatprep.mubr.bf16.mxu0 0
      %1107 = vmatmul.mubr.bf16.gmra.mrb[0].mxu0 %v693
      %v1108 = vpop.f32.mrb[0].mxu0
      %v1109 = vadd.f32 0.0, %v1108
      %v1110 = vpop.f32.mrb[0].mxu0
      %v1111 = vpop.f32.mrb[0].mxu0
      %v1112 = vadd.f32 0.0, %v1111
      %v1113 = vpop.f32.mrb[0].mxu0
      %1114 = vmatprep.mubr.bf16.mxu0 0
      %1115 = vmatmul.mubr.bf16.gmra.mrb[0].mxu0 %v696
      %v1116 = vpop.f32.mrb[0].mxu0
      %v1117 = vadd.f32 0.0, %v1116
      %v1118 = vpop.f32.mrb[0].mxu0
      %v1119 = vpop.f32.mrb[0].mxu0
      %v1120 = vadd.f32 0.0, %v1119
      %v1121 = vpop.f32.mrb[0].mxu0
      %1122 = vmatprep.mubr.bf16.mxu0 0
      %1123 = vmatmul.mubr.bf16.gmra.mrb[0].mxu0 %v699
      %v1124 = vpop.f32.mrb[0].mxu0
      %v1125 = vadd.f32 0.0, %v1124
      %v1126 = vpop.f32.mrb[0].mxu0
      %v1127 = vpop.f32.mrb[0].mxu0
      %v1128 = vadd.f32 0.0, %v1127
      %v1129 = vpop.f32.mrb[0].mxu0
      %1130 = vmatprep.mubr.bf16.mxu0 0
      %1131 = vmatmul.mubr.bf16.gmra.mrb[0].mxu0 %v702
      %v1132 = vpop.f32.mrb[0].mxu0
      %v1133 = vadd.f32 0.0, %v1132
      %v1134 = vpop.f32.mrb[0].mxu0
      %v1135 = vpop.f32.mrb[0].mxu0
      %v1136 = vadd.f32 0.0, %v1135
      %v1137 = vpop.f32.mrb[0].mxu0
      %1138 = vmatprep.mubr.bf16.mxu0 0
      %1139 = vmatmul.mubr.bf16.gmra.mrb[0].mxu0 %v705
      %v1140 = vpop.f32.mrb[0].mxu0
      %v1141 = vadd.f32 0.0, %v1140
      %v1142 = vpop.f32.mrb[0].mxu0
      %v1143 = vpop.f32.mrb[0].mxu0
      %v1144 = vadd.f32 0.0, %v1143
      %v1145 = vpop.f32.mrb[0].mxu0
      %1146 = vmatprep.mubr.bf16.mxu0 0
      %1147 = vmatmul.mubr.bf16.gmra.mrb[0].mxu0 %v1056
      %v1148 = vpop.f32.mrb[0].mxu0
      %v1149 = vadd.f32 0.0, %v1148
      %v1150 = vpop.f32.mrb[0].mxu0
      %v1151 = vpop.f32.mrb[0].mxu0
      %v1152 = vadd.f32 0.0, %v1151
      %v1153 = vpop.f32.mrb[0].mxu0
      %1154 = vdwg.mxu0
      %v1155 = vadd.f32 %v1025, %v1093
      %v1156 = vadd.f32 %v1026, %v1096
      %v1157 = vadd.f32 %v1027, %v1101
      %v1158 = vadd.f32 %v1028, %v1104
      %v1159 = vadd.f32 %v1029, %v1109
      %v1160 = vadd.f32 %v1030, %v1112
      %v1161 = vadd.f32 %v1031, %v1117
      %v1162 = vadd.f32 %v1032, %v1120
      %v1163 = vadd.f32 %v1033, %v1125
      %v1164 = vadd.f32 %v1034, %v1128
      %v1165 = vadd.f32 %v1035, %v1133
      %v1166 = vadd.f32 %v1036, %v1136
      %v1167 = vadd.f32 %v1037, %v1141
      %v1168 = vadd.f32 %v1038, %v1144
      %v1169 = vadd.f32 %v1039, %v1149
      %v1170 = vadd.f32 %v1040, %v1152
      %v1172 = vshrl.u32 %v279, 16
      %v1174 = vrot.slane %v1172, 4
      %v1175 = vshll.u32 %v279, 16
      %v1177 = vrot.slane %v1175, 5
      %v1178 = vor.u32 %v1174, %v1177
      %v1179 = vrot.slane %v1178, 4
      %v1181 = vshll.u32 %v280, 16
      %v1183 = vrot.slane %v1181, 5
      %v1184 = vsel %vm289, %v1179, %v1183
      %v1185 = vshrl.u32 %v280, 16
      %v1187 = vrot.slane %v1185, 4
      %v1188 = vor.u32 %v1187, %v1183
      %v1189 = vrot.slane %v1188, 4
      %v1191 = vshll.u32 %v281, 16
      %v1193 = vrot.slane %v1191, 5
      %v1194 = vsel %vm289, %v1189, %v1193
      %s1195 = scalar_lea.vmem %s1, 32
      %v1196 = vld [vmem:[%s1195] sm:$0xf]
      %v1197 = vld [vmem:[%s1195 + $0x4] sm:$0xf]
      %v1198 = vunpack.c.l.b16 %v1184
      %v1199 = vunpack.c.l.b16 %v1194
      %v1200 = vpack.c.b16 %v1199, %v1198
      %v1203 = vunpack.c.l.b16 %v1196
      %v1204 = vunpack.c.l.b16 %v1197
      %v1205 = vpack.c.b16 %v1204, %v1203
      %v1208 = vsel %vm515, %v1200, 0
      %1210 = vmatprep.subr.bf16.mxu0 0
      %1211 = vmatpush1.bf16.msra.mxu0 %v1205
      %1212 = vmatprep.subr.bf16.mxu0 0
      %1213 = vmatpush1.bf16.msra.mxu0 0
      %1214 = vmatprep.subr.bf16.mxu0 0
      %1215 = vmatpush1.bf16.msra.mxu0 0
      %1216 = vmatprep.subr.bf16.mxu0 0
      %1217 = vmatpush1.bf16.msra.mxu0 0
      %1218 = vmatprep.subr.bf16.mxu0 0
      %1219 = vmatpush1.bf16.msra.mxu0 0
      %1220 = vmatprep.subr.bf16.mxu0 0
      %1221 = vmatpush1.bf16.msra.mxu0 0
      %1222 = vmatprep.subr.bf16.mxu0 0
      %1223 = vmatpush1.bf16.msra.mxu0 0
      %1224 = vmatprep.subr.bf16.mxu0 0
      %1225 = vmatpush1.bf16.msra.mxu0 0
      %1226 = vmatprep.subr.bf16.mxu0 0
      %1227 = vmatpush1.bf16.msra.mxu0 0
      %1228 = vmatprep.subr.bf16.mxu0 0
      %1229 = vmatpush1.bf16.msra.mxu0 0
      %1230 = vmatprep.subr.bf16.mxu0 0
      %1231 = vmatpush1.bf16.msra.mxu0 0
      %1232 = vmatprep.subr.bf16.mxu0 0
      %1233 = vmatpush1.bf16.msra.mxu0 0
      %1234 = vmatprep.subr.bf16.mxu0 0
      %1235 = vmatpush1.bf16.msra.mxu0 0
      %1236 = vmatprep.subr.bf16.mxu0 0
      %1237 = vmatpush1.bf16.msra.mxu0 0
      %1238 = vmatprep.subr.bf16.mxu0 0
      %1239 = vmatpush1.bf16.msra.mxu0 0
      %1240 = vmatprep.subr.bf16.mxu0 0
      %1241 = vmatpush1.bf16.msra.mxu0 0
      %1242 = vmatprep.mubr.bf16.mxu0 0
      %1243 = vmatmul.mubr.bf16.gmra.mrb[0].mxu0 %v520
      %v1244 = vpop.f32.mrb[0].mxu0
      %v1245 = vadd.f32 0.0, %v1244
      %v1246 = vpop.f32.mrb[0].mxu0
      %v1247 = vpop.f32.mrb[0].mxu0
      %v1248 = vadd.f32 0.0, %v1247
      %v1249 = vpop.f32.mrb[0].mxu0
      %1250 = vmatprep.mubr.bf16.mxu0 0
      %1251 = vmatmul.mubr.bf16.gmra.mrb[0].mxu0 %v523
      %v1252 = vpop.f32.mrb[0].mxu0
      %v1253 = vadd.f32 0.0, %v1252
      %v1254 = vpop.f32.mrb[0].mxu0
      %v1255 = vpop.f32.mrb[0].mxu0
      %v1256 = vadd.f32 0.0, %v1255
      %v1257 = vpop.f32.mrb[0].mxu0
      %1258 = vmatprep.mubr.bf16.mxu0 0
      %1259 = vmatmul.mubr.bf16.gmra.mrb[0].mxu0 %v526
      %v1260 = vpop.f32.mrb[0].mxu0
      %v1261 = vadd.f32 0.0, %v1260
      %v1262 = vpop.f32.mrb[0].mxu0
      %v1263 = vpop.f32.mrb[0].mxu0
      %v1264 = vadd.f32 0.0, %v1263
      %v1265 = vpop.f32.mrb[0].mxu0
      %1266 = vmatprep.mubr.bf16.mxu0 0
      %1267 = vmatmul.mubr.bf16.gmra.mrb[0].mxu0 %v529
      %v1268 = vpop.f32.mrb[0].mxu0
      %v1269 = vadd.f32 0.0, %v1268
      %v1270 = vpop.f32.mrb[0].mxu0
      %v1271 = vpop.f32.mrb[0].mxu0
      %v1272 = vadd.f32 0.0, %v1271
      %v1273 = vpop.f32.mrb[0].mxu0
      %1274 = vmatprep.mubr.bf16.mxu0 0
      %1275 = vmatmul.mubr.bf16.gmra.mrb[0].mxu0 %v532
      %v1276 = vpop.f32.mrb[0].mxu0
      %v1277 = vadd.f32 0.0, %v1276
      %v1278 = vpop.f32.mrb[0].mxu0
      %v1279 = vpop.f32.mrb[0].mxu0
      %v1280 = vadd.f32 0.0, %v1279
      %v1281 = vpop.f32.mrb[0].mxu0
      %1282 = vmatprep.mubr.bf16.mxu0 0
      %1283 = vmatmul.mubr.bf16.gmra.mrb[0].mxu0 %v535
      %v1284 = vpop.f32.mrb[0].mxu0
      %v1285 = vadd.f32 0.0, %v1284
      %v1286 = vpop.f32.mrb[0].mxu0
      %v1287 = vpop.f32.mrb[0].mxu0
      %v1288 = vadd.f32 0.0, %v1287
      %v1289 = vpop.f32.mrb[0].mxu0
      %1290 = vmatprep.mubr.bf16.mxu0 0
      %1291 = vmatmul.mubr.bf16.gmra.mrb[0].mxu0 %v538
      %v1292 = vpop.f32.mrb[0].mxu0
      %v1293 = vadd.f32 0.0, %v1292
      %v1294 = vpop.f32.mrb[0].mxu0
      %v1295 = vpop.f32.mrb[0].mxu0
      %v1296 = vadd.f32 0.0, %v1295
      %v1297 = vpop.f32.mrb[0].mxu0
      %1298 = vmatprep.mubr.bf16.mxu0 0
      %1299 = vmatmul.mubr.bf16.gmra.mrb[0].mxu0 %v1208
      %v1300 = vpop.f32.mrb[0].mxu0
      %v1301 = vadd.f32 0.0, %v1300
      %v1302 = vpop.f32.mrb[0].mxu0
      %v1303 = vpop.f32.mrb[0].mxu0
      %v1304 = vadd.f32 0.0, %v1303
      %v1305 = vpop.f32.mrb[0].mxu0
      %1306 = vdwg.mxu0
      %v1307 = vadd.f32 %v1155, %v1245
      %v1308 = vadd.f32 %v1156, %v1248
      %v1309 = vadd.f32 %v1157, %v1253
      %v1310 = vadd.f32 %v1158, %v1256
      %v1311 = vadd.f32 %v1159, %v1261
      %v1312 = vadd.f32 %v1160, %v1264
      %v1313 = vadd.f32 %v1161, %v1269
      %v1314 = vadd.f32 %v1162, %v1272
      %v1315 = vadd.f32 %v1163, %v1277
      %v1316 = vadd.f32 %v1164, %v1280
      %v1317 = vadd.f32 %v1165, %v1285
      %v1318 = vadd.f32 %v1166, %v1288
      %v1319 = vadd.f32 %v1167, %v1293
      %v1320 = vadd.f32 %v1168, %v1296
      %v1321 = vadd.f32 %v1169, %v1301
      %v1322 = vadd.f32 %v1170, %v1304
      %v1324 = vrot.slane %v279, 5
      %v1325 = vrot.slane %v1324, 4
      %v1326 = vrot.slane %v280, 5
      %v1327 = vsel %vm814, %v1325, %v1326
      %v1328 = vrot.slane %v1326, 4
      %v1329 = vrot.slane %v281, 5
      %v1330 = vsel %vm814, %v1328, %v1329
      %s1331 = scalar_lea.vmem %s1, 40
      %v1332 = vld [vmem:[%s1331] sm:$0xf]
      %v1333 = vld [vmem:[%s1331 + $0x4] sm:$0xf]
      %v1334 = vunpack.c.l.b16 %v1327
      %v1335 = vunpack.c.l.b16 %v1330
      %v1336 = vpack.c.b16 %v1335, %v1334
      %v1339 = vunpack.c.l.b16 %v1332
      %v1340 = vunpack.c.l.b16 %v1333
      %v1341 = vpack.c.b16 %v1340, %v1339
      %v1344 = vsel %vm515, %v1336, 0
      %1346 = vmatprep.subr.bf16.mxu0 0
      %1347 = vmatpush1.bf16.msra.mxu0 %v1341
      %1348 = vmatprep.subr.bf16.mxu0 0
      %1349 = vmatpush1.bf16.msra.mxu0 0
      %1350 = vmatprep.subr.bf16.mxu0 0
      %1351 = vmatpush1.bf16.msra.mxu0 0
      %1352 = vmatprep.subr.bf16.mxu0 0
      %1353 = vmatpush1.bf16.msra.mxu0 0
      %1354 = vmatprep.subr.bf16.mxu0 0
      %1355 = vmatpush1.bf16.msra.mxu0 0
      %1356 = vmatprep.subr.bf16.mxu0 0
      %1357 = vmatpush1.bf16.msra.mxu0 0
      %1358 = vmatprep.subr.bf16.mxu0 0
      %1359 = vmatpush1.bf16.msra.mxu0 0
      %1360 = vmatprep.subr.bf16.mxu0 0
      %1361 = vmatpush1.bf16.msra.mxu0 0
      %1362 = vmatprep.subr.bf16.mxu0 0
      %1363 = vmatpush1.bf16.msra.mxu0 0
      %1364 = vmatprep.subr.bf16.mxu0 0
      %1365 = vmatpush1.bf16.msra.mxu0 0
      %1366 = vmatprep.subr.bf16.mxu0 0
      %1367 = vmatpush1.bf16.msra.mxu0 0
      %1368 = vmatprep.subr.bf16.mxu0 0
      %1369 = vmatpush1.bf16.msra.mxu0 0
      %1370 = vmatprep.subr.bf16.mxu0 0
      %1371 = vmatpush1.bf16.msra.mxu0 0
      %1372 = vmatprep.subr.bf16.mxu0 0
      %1373 = vmatpush1.bf16.msra.mxu0 0
      %1374 = vmatprep.subr.bf16.mxu0 0
      %1375 = vmatpush1.bf16.msra.mxu0 0
      %1376 = vmatprep.subr.bf16.mxu0 0
      %1377 = vmatpush1.bf16.msra.mxu0 0
      %1378 = vmatprep.mubr.bf16.mxu0 0
      %1379 = vmatmul.mubr.bf16.gmra.mrb[0].mxu0 %v908
      %v1380 = vpop.f32.mrb[0].mxu0
      %v1381 = vadd.f32 0.0, %v1380
      %v1382 = vpop.f32.mrb[0].mxu0
      %v1383 = vpop.f32.mrb[0].mxu0
      %v1384 = vadd.f32 0.0, %v1383
      %v1385 = vpop.f32.mrb[0].mxu0
      %1386 = vmatprep.mubr.bf16.mxu0 0
      %1387 = vmatmul.mubr.bf16.gmra.mrb[0].mxu0 %v911
      %v1388 = vpop.f32.mrb[0].mxu0
      %v1389 = vadd.f32 0.0, %v1388
      %v1390 = vpop.f32.mrb[0].mxu0
      %v1391 = vpop.f32.mrb[0].mxu0
      %v1392 = vadd.f32 0.0, %v1391
      %v1393 = vpop.f32.mrb[0].mxu0
      %1394 = vmatprep.mubr.bf16.mxu0 0
      %1395 = vmatmul.mubr.bf16.gmra.mrb[0].mxu0 %v914
      %v1396 = vpop.f32.mrb[0].mxu0
      %v1397 = vadd.f32 0.0, %v1396
      %v1398 = vpop.f32.mrb[0].mxu0
      %v1399 = vpop.f32.mrb[0].mxu0
      %v1400 = vadd.f32 0.0, %v1399
      %v1401 = vpop.f32.mrb[0].mxu0
      %1402 = vmatprep.mubr.bf16.mxu0 0
      %1403 = vmatmul.mubr.bf16.gmra.mrb[0].mxu0 %v917
      %v1404 = vpop.f32.mrb[0].mxu0
      %v1405 = vadd.f32 0.0, %v1404
      %v1406 = vpop.f32.mrb[0].mxu0
      %v1407 = vpop.f32.mrb[0].mxu0
      %v1408 = vadd.f32 0.0, %v1407
      %v1409 = vpop.f32.mrb[0].mxu0
      %1410 = vmatprep.mubr.bf16.mxu0 0
      %1411 = vmatmul.mubr.bf16.gmra.mrb[0].mxu0 %v920
      %v1412 = vpop.f32.mrb[0].mxu0
      %v1413 = vadd.f32 0.0, %v1412
      %v1414 = vpop.f32.mrb[0].mxu0
      %v1415 = vpop.f32.mrb[0].mxu0
      %v1416 = vadd.f32 0.0, %v1415
      %v1417 = vpop.f32.mrb[0].mxu0
      %1418 = vmatprep.mubr.bf16.mxu0 0
      %1419 = vmatmul.mubr.bf16.gmra.mrb[0].mxu0 %v923
      %v1420 = vpop.f32.mrb[0].mxu0
      %v1421 = vadd.f32 0.0, %v1420
      %v1422 = vpop.f32.mrb[0].mxu0
      %v1423 = vpop.f32.mrb[0].mxu0
      %v1424 = vadd.f32 0.0, %v1423
      %v1425 = vpop.f32.mrb[0].mxu0
      %1426 = vmatprep.mubr.bf16.mxu0 0
      %1427 = vmatmul.mubr.bf16.gmra.mrb[0].mxu0 %v926
      %v1428 = vpop.f32.mrb[0].mxu0
      %v1429 = vadd.f32 0.0, %v1428
      %v1430 = vpop.f32.mrb[0].mxu0
      %v1431 = vpop.f32.mrb[0].mxu0
      %v1432 = vadd.f32 0.0, %v1431
      %v1433 = vpop.f32.mrb[0].mxu0
      %1434 = vmatprep.mubr.bf16.mxu0 0
      %1435 = vmatmul.mubr.bf16.gmra.mrb[0].mxu0 %v1344
      %v1436 = vpop.f32.mrb[0].mxu0
      %v1437 = vadd.f32 0.0, %v1436
      %v1438 = vpop.f32.mrb[0].mxu0
      %v1439 = vpop.f32.mrb[0].mxu0
      %v1440 = vadd.f32 0.0, %v1439
      %v1441 = vpop.f32.mrb[0].mxu0
      %1442 = vdwg.mxu0
      %v1443 = vadd.f32 %v1307, %v1381
      %v1444 = vadd.f32 %v1308, %v1384
      %v1445 = vadd.f32 %v1309, %v1389
      %v1446 = vadd.f32 %v1310, %v1392
      %v1447 = vadd.f32 %v1311, %v1397
      %v1448 = vadd.f32 %v1312, %v1400
      %v1449 = vadd.f32 %v1313, %v1405
      %v1450 = vadd.f32 %v1314, %v1408
      %v1451 = vadd.f32 %v1315, %v1413
      %v1452 = vadd.f32 %v1316, %v1416
      %v1453 = vadd.f32 %v1317, %v1421
      %v1454 = vadd.f32 %v1318, %v1424
      %v1455 = vadd.f32 %v1319, %v1429
      %v1456 = vadd.f32 %v1320, %v1432
      %v1457 = vadd.f32 %v1321, %v1437
      %v1458 = vadd.f32 %v1322, %v1440
      %s1459 = scalar_lea.vmem %s1, 48
      %v1460 = vld [vmem:[%s1459] sm:$0xf]
      %v1461 = vld [vmem:[%s1459 + $0x4] sm:$0xf]
      %v1464 = vunpack.c.l.b16 %v282
      %v1465 = vunpack.c.l.b16 %v283
      %v1466 = vpack.c.b16 %v1465, %v1464
      %v1469 = vunpack.c.l.b16 %v1460
      %v1470 = vunpack.c.l.b16 %v1461
      %v1471 = vpack.c.b16 %v1470, %v1469
      %v1474 = vsel %vm515, %v1466, 0
      %1476 = vmatprep.subr.bf16.mxu0 0
      %1477 = vmatpush1.bf16.msra.mxu0 %v1471
      %1478 = vmatprep.subr.bf16.mxu0 0
      %1479 = vmatpush1.bf16.msra.mxu0 0
      %1480 = vmatprep.subr.bf16.mxu0 0
      %1481 = vmatpush1.bf16.msra.mxu0 0
      %1482 = vmatprep.subr.bf16.mxu0 0
      %1483 = vmatpush1.bf16.msra.mxu0 0
      %1484 = vmatprep.subr.bf16.mxu0 0
      %1485 = vmatpush1.bf16.msra.mxu0 0
      %1486 = vmatprep.subr.bf16.mxu0 0
      %1487 = vmatpush1.bf16.msra.mxu0 0
      %1488 = vmatprep.subr.bf16.mxu0 0
      %1489 = vmatpush1.bf16.msra.mxu0 0
      %1490 = vmatprep.subr.bf16.mxu0 0
      %1491 = vmatpush1.bf16.msra.mxu0 0
      %1492 = vmatprep.subr.bf16.mxu0 0
      %1493 = vmatpush1.bf16.msra.mxu0 0
      %1494 = vmatprep.subr.bf16.mxu0 0
      %1495 = vmatpush1.bf16.msra.mxu0 0
      %1496 = vmatprep.subr.bf16.mxu0 0
      %1497 = vmatpush1.bf16.msra.mxu0 0
      %1498 = vmatprep.subr.bf16.mxu0 0
      %1499 = vmatpush1.bf16.msra.mxu0 0
      %1500 = vmatprep.subr.bf16.mxu0 0
      %1501 = vmatpush1.bf16.msra.mxu0 0
      %1502 = vmatprep.subr.bf16.mxu0 0
      %1503 = vmatpush1.bf16.msra.mxu0 0
      %1504 = vmatprep.subr.bf16.mxu0 0
      %1505 = vmatpush1.bf16.msra.mxu0 0
      %1506 = vmatprep.subr.bf16.mxu0 0
      %1507 = vmatpush1.bf16.msra.mxu0 0
      %1508 = vmatprep.mubr.bf16.mxu0 0
      %1509 = vmatmul.mubr.bf16.gmra.mrb[0].mxu0 %v690
      %v1510 = vpop.f32.mrb[0].mxu0
      %v1511 = vadd.f32 0.0, %v1510
      %v1512 = vpop.f32.mrb[0].mxu0
      %v1513 = vpop.f32.mrb[0].mxu0
      %v1514 = vadd.f32 0.0, %v1513
      %v1515 = vpop.f32.mrb[0].mxu0
      %1516 = vmatprep.mubr.bf16.mxu0 0
      %1517 = vmatmul.mubr.bf16.gmra.mrb[0].mxu0 %v693
      %v1518 = vpop.f32.mrb[0].mxu0
      %v1519 = vadd.f32 0.0, %v1518
      %v1520 = vpop.f32.mrb[0].mxu0
      %v1521 = vpop.f32.mrb[0].mxu0
      %v1522 = vadd.f32 0.0, %v1521
      %v1523 = vpop.f32.mrb[0].mxu0
      %1524 = vmatprep.mubr.bf16.mxu0 0
      %1525 = vmatmul.mubr.bf16.gmra.mrb[0].mxu0 %v696
      %v1526 = vpop.f32.mrb[0].mxu0
      %v1527 = vadd.f32 0.0, %v1526
      %v1528 = vpop.f32.mrb[0].mxu0
      %v1529 = vpop.f32.mrb[0].mxu0
      %v1530 = vadd.f32 0.0, %v1529
      %v1531 = vpop.f32.mrb[0].mxu0
      %1532 = vmatprep.mubr.bf16.mxu0 0
      %1533 = vmatmul.mubr.bf16.gmra.mrb[0].mxu0 %v699
      %v1534 = vpop.f32.mrb[0].mxu0
      %v1535 = vadd.f32 0.0, %v1534
      %v1536 = vpop.f32.mrb[0].mxu0
      %v1537 = vpop.f32.mrb[0].mxu0
      %v1538 = vadd.f32 0.0, %v1537
      %v1539 = vpop.f32.mrb[0].mxu0
      %1540 = vmatprep.mubr.bf16.mxu0 0
      %1541 = vmatmul.mubr.bf16.gmra.mrb[0].mxu0 %v702
      %v1542 = vpop.f32.mrb[0].mxu0
      %v1543 = vadd.f32 0.0, %v1542
      %v1544 = vpop.f32.mrb[0].mxu0
      %v1545 = vpop.f32.mrb[0].mxu0
      %v1546 = vadd.f32 0.0, %v1545
      %v1547 = vpop.f32.mrb[0].mxu0
      %1548 = vmatprep.mubr.bf16.mxu0 0
      %1549 = vmatmul.mubr.bf16.gmra.mrb[0].mxu0 %v705
      %v1550 = vpop.f32.mrb[0].mxu0
      %v1551 = vadd.f32 0.0, %v1550
      %v1552 = vpop.f32.mrb[0].mxu0
      %v1553 = vpop.f32.mrb[0].mxu0
      %v1554 = vadd.f32 0.0, %v1553
      %v1555 = vpop.f32.mrb[0].mxu0
      %1556 = vmatprep.mubr.bf16.mxu0 0
      %1557 = vmatmul.mubr.bf16.gmra.mrb[0].mxu0 %v1056
      %v1558 = vpop.f32.mrb[0].mxu0
      %v1559 = vadd.f32 0.0, %v1558
      %v1560 = vpop.f32.mrb[0].mxu0
      %v1561 = vpop.f32.mrb[0].mxu0
      %v1562 = vadd.f32 0.0, %v1561
      %v1563 = vpop.f32.mrb[0].mxu0
      %1564 = vmatprep.mubr.bf16.mxu0 0
      %1565 = vmatmul.mubr.bf16.gmra.mrb[0].mxu0 %v1474
      %v1566 = vpop.f32.mrb[0].mxu0
      %v1567 = vadd.f32 0.0, %v1566
      %v1568 = vpop.f32.mrb[0].mxu0
      %v1569 = vpop.f32.mrb[0].mxu0
      %v1570 = vadd.f32 0.0, %v1569
      %v1571 = vpop.f32.mrb[0].mxu0
      %1572 = vdwg.mxu0
      %v1573 = vadd.f32 %v1443, %v1511
      %v1574 = vadd.f32 %v1444, %v1514
      %v1575 = vadd.f32 %v1445, %v1519
      %v1576 = vadd.f32 %v1446, %v1522
      %v1577 = vadd.f32 %v1447, %v1527
      %v1578 = vadd.f32 %v1448, %v1530
      %v1579 = vadd.f32 %v1449, %v1535
      %v1580 = vadd.f32 %v1450, %v1538
      %v1581 = vadd.f32 %v1451, %v1543
      %v1582 = vadd.f32 %v1452, %v1546
      %v1583 = vadd.f32 %v1453, %v1551
      %v1584 = vadd.f32 %v1454, %v1554
      %v1585 = vadd.f32 %v1455, %v1559
      %v1586 = vadd.f32 %v1456, %v1562
      %v1587 = vadd.f32 %v1457, %v1567
      %v1588 = vadd.f32 %v1458, %v1570
      %v1590 = vshrl.u32 %v282, 16
      %v1592 = vrot.slane %v1590, 4
      %v1593 = vshll.u32 %v282, 16
      %v1595 = vrot.slane %v1593, 5
      %v1596 = vor.u32 %v1592, %v1595
      %v1597 = vrot.slane %v1596, 4
      %v1599 = vshll.u32 %v283, 16
      %v1601 = vrot.slane %v1599, 5
      %v1602 = vsel %vm289, %v1597, %v1601
      %v1603 = vshrl.u32 %v283, 16
      %v1605 = vrot.slane %v1603, 4
      %v1606 = vor.u32 %v1605, %v1601
      %v1607 = vrot.slane %v1606, 4
      %v1609 = vshll.u32 %v284, 16
      %v1611 = vrot.slane %v1609, 5
      %v1612 = vsel %vm289, %v1607, %v1611
      %s1613 = scalar_lea.vmem %s1, 56
      %v1614 = vld [vmem:[%s1613] sm:$0xf]
      %v1615 = vld [vmem:[%s1613 + $0x4] sm:$0xf]
      %v1616 = vunpack.c.l.b16 %v1602
      %v1617 = vunpack.c.l.b16 %v1612
      %v1618 = vpack.c.b16 %v1617, %v1616
      %v1621 = vunpack.c.l.b16 %v1614
      %v1622 = vunpack.c.l.b16 %v1615
      %v1623 = vpack.c.b16 %v1622, %v1621
      %v1626 = vsel %vm515, %v1618, 0
      %1628 = vmatprep.subr.bf16.mxu0 0
      %1629 = vmatpush1.bf16.msra.mxu0 %v1623
      %1630 = vmatprep.subr.bf16.mxu0 0
      %1631 = vmatpush1.bf16.msra.mxu0 0
      %1632 = vmatprep.subr.bf16.mxu0 0
      %1633 = vmatpush1.bf16.msra.mxu0 0
      %1634 = vmatprep.subr.bf16.mxu0 0
      %1635 = vmatpush1.bf16.msra.mxu0 0
      %1636 = vmatprep.subr.bf16.mxu0 0
      %1637 = vmatpush1.bf16.msra.mxu0 0
      %1638 = vmatprep.subr.bf16.mxu0 0
      %1639 = vmatpush1.bf16.msra.mxu0 0
      %1640 = vmatprep.subr.bf16.mxu0 0
      %1641 = vmatpush1.bf16.msra.mxu0 0
      %1642 = vmatprep.subr.bf16.mxu0 0
      %1643 = vmatpush1.bf16.msra.mxu0 0
      %1644 = vmatprep.subr.bf16.mxu0 0
      %1645 = vmatpush1.bf16.msra.mxu0 0
      %1646 = vmatprep.subr.bf16.mxu0 0
      %1647 = vmatpush1.bf16.msra.mxu0 0
      %1648 = vmatprep.subr.bf16.mxu0 0
      %1649 = vmatpush1.bf16.msra.mxu0 0
      %1650 = vmatprep.subr.bf16.mxu0 0
      %1651 = vmatpush1.bf16.msra.mxu0 0
      %1652 = vmatprep.subr.bf16.mxu0 0
      %1653 = vmatpush1.bf16.msra.mxu0 0
      %1654 = vmatprep.subr.bf16.mxu0 0
      %1655 = vmatpush1.bf16.msra.mxu0 0
      %1656 = vmatprep.subr.bf16.mxu0 0
      %1657 = vmatpush1.bf16.msra.mxu0 0
      %1658 = vmatprep.subr.bf16.mxu0 0
      %1659 = vmatpush1.bf16.msra.mxu0 0
      %1660 = vmatprep.mubr.bf16.mxu0 0
      %1661 = vmatmul.mubr.bf16.gmra.mrb[0].mxu0 %v523
      %v1662 = vpop.f32.mrb[0].mxu0
      %v1663 = vadd.f32 0.0, %v1662
      %v1664 = vpop.f32.mrb[0].mxu0
      %v1665 = vpop.f32.mrb[0].mxu0
      %v1666 = vadd.f32 0.0, %v1665
      %v1667 = vpop.f32.mrb[0].mxu0
      %1668 = vmatprep.mubr.bf16.mxu0 0
      %1669 = vmatmul.mubr.bf16.gmra.mrb[0].mxu0 %v526
      %v1670 = vpop.f32.mrb[0].mxu0
      %v1671 = vadd.f32 0.0, %v1670
      %v1672 = vpop.f32.mrb[0].mxu0
      %v1673 = vpop.f32.mrb[0].mxu0
      %v1674 = vadd.f32 0.0, %v1673
      %v1675 = vpop.f32.mrb[0].mxu0
      %1676 = vmatprep.mubr.bf16.mxu0 0
      %1677 = vmatmul.mubr.bf16.gmra.mrb[0].mxu0 %v529
      %v1678 = vpop.f32.mrb[0].mxu0
      %v1679 = vadd.f32 0.0, %v1678
      %v1680 = vpop.f32.mrb[0].mxu0
      %v1681 = vpop.f32.mrb[0].mxu0
      %v1682 = vadd.f32 0.0, %v1681
      %v1683 = vpop.f32.mrb[0].mxu0
      %1684 = vmatprep.mubr.bf16.mxu0 0
      %1685 = vmatmul.mubr.bf16.gmra.mrb[0].mxu0 %v532
      %v1686 = vpop.f32.mrb[0].mxu0
      %v1687 = vadd.f32 0.0, %v1686
      %v1688 = vpop.f32.mrb[0].mxu0
      %v1689 = vpop.f32.mrb[0].mxu0
      %v1690 = vadd.f32 0.0, %v1689
      %v1691 = vpop.f32.mrb[0].mxu0
      %1692 = vmatprep.mubr.bf16.mxu0 0
      %1693 = vmatmul.mubr.bf16.gmra.mrb[0].mxu0 %v535
      %v1694 = vpop.f32.mrb[0].mxu0
      %v1695 = vadd.f32 0.0, %v1694
      %v1696 = vpop.f32.mrb[0].mxu0
      %v1697 = vpop.f32.mrb[0].mxu0
      %v1698 = vadd.f32 0.0, %v1697
      %v1699 = vpop.f32.mrb[0].mxu0
      %1700 = vmatprep.mubr.bf16.mxu0 0
      %1701 = vmatmul.mubr.bf16.gmra.mrb[0].mxu0 %v538
      %v1702 = vpop.f32.mrb[0].mxu0
      %v1703 = vadd.f32 0.0, %v1702
      %v1704 = vpop.f32.mrb[0].mxu0
      %v1705 = vpop.f32.mrb[0].mxu0
      %v1706 = vadd.f32 0.0, %v1705
      %v1707 = vpop.f32.mrb[0].mxu0
      %1708 = vmatprep.mubr.bf16.mxu0 0
      %1709 = vmatmul.mubr.bf16.gmra.mrb[0].mxu0 %v1208
      %v1710 = vpop.f32.mrb[0].mxu0
      %v1711 = vadd.f32 0.0, %v1710
      %v1712 = vpop.f32.mrb[0].mxu0
      %v1713 = vpop.f32.mrb[0].mxu0
      %v1714 = vadd.f32 0.0, %v1713
      %v1715 = vpop.f32.mrb[0].mxu0
      %1716 = vmatprep.mubr.bf16.mxu0 0
      %1717 = vmatmul.mubr.bf16.gmra.mrb[0].mxu0 %v1626
      %v1718 = vpop.f32.mrb[0].mxu0
      %v1719 = vadd.f32 0.0, %v1718
      %v1720 = vpop.f32.mrb[0].mxu0
      %v1721 = vpop.f32.mrb[0].mxu0
      %v1722 = vadd.f32 0.0, %v1721
      %v1723 = vpop.f32.mrb[0].mxu0
      %1724 = vdwg.mxu0
      %v1725 = vadd.f32 %v1573, %v1663
      %v1726 = vadd.f32 %v1574, %v1666
      %v1727 = vadd.f32 %v1575, %v1671
      %v1728 = vadd.f32 %v1576, %v1674
      %v1729 = vadd.f32 %v1577, %v1679
      %v1730 = vadd.f32 %v1578, %v1682
      %v1731 = vadd.f32 %v1579, %v1687
      %v1732 = vadd.f32 %v1580, %v1690
      %v1733 = vadd.f32 %v1581, %v1695
      %v1734 = vadd.f32 %v1582, %v1698
      %v1735 = vadd.f32 %v1583, %v1703
      %v1736 = vadd.f32 %v1584, %v1706
      %v1737 = vadd.f32 %v1585, %v1711
      %v1738 = vadd.f32 %v1586, %v1714
      %v1739 = vadd.f32 %v1587, %v1719
      %v1740 = vadd.f32 %v1588, %v1722
      %v1742 = vrot.slane %v282, 5
      %v1743 = vrot.slane %v1742, 4
      %v1744 = vrot.slane %v283, 5
      %v1745 = vsel %vm814, %v1743, %v1744
      %v1746 = vrot.slane %v1744, 4
      %v1747 = vrot.slane %v284, 5
      %v1748 = vsel %vm814, %v1746, %v1747
      %s1749 = scalar_lea.vmem %s1, 64
      %v1750 = vld [vmem:[%s1749] sm:$0xf]
      %v1751 = vld [vmem:[%s1749 + $0x4] sm:$0xf]
      %v1752 = vunpack.c.l.b16 %v1745
      %v1753 = vunpack.c.l.b16 %v1748
      %v1754 = vpack.c.b16 %v1753, %v1752
      %v1757 = vunpack.c.l.b16 %v1750
      %v1758 = vunpack.c.l.b16 %v1751
      %v1759 = vpack.c.b16 %v1758, %v1757
      %v1762 = vsel %vm515, %v1754, 0
      %1764 = vmatprep.subr.bf16.mxu0 0
      %1765 = vmatpush1.bf16.msra.mxu0 %v1759
      %1766 = vmatprep.subr.bf16.mxu0 0
      %1767 = vmatpush1.bf16.msra.mxu0 0
      %1768 = vmatprep.subr.bf16.mxu0 0
      %1769 = vmatpush1.bf16.msra.mxu0 0
      %1770 = vmatprep.subr.bf16.mxu0 0
      %1771 = vmatpush1.bf16.msra.mxu0 0
      %1772 = vmatprep.subr.bf16.mxu0 0
      %1773 = vmatpush1.bf16.msra.mxu0 0
      %1774 = vmatprep.subr.bf16.mxu0 0
      %1775 = vmatpush1.bf16.msra.mxu0 0
      %1776 = vmatprep.subr.bf16.mxu0 0
      %1777 = vmatpush1.bf16.msra.mxu0 0
      %1778 = vmatprep.subr.bf16.mxu0 0
      %1779 = vmatpush1.bf16.msra.mxu0 0
      %1780 = vmatprep.subr.bf16.mxu0 0
      %1781 = vmatpush1.bf16.msra.mxu0 0
      %1782 = vmatprep.subr.bf16.mxu0 0
      %1783 = vmatpush1.bf16.msra.mxu0 0
      %1784 = vmatprep.subr.bf16.mxu0 0
      %1785 = vmatpush1.bf16.msra.mxu0 0
      %1786 = vmatprep.subr.bf16.mxu0 0
      %1787 = vmatpush1.bf16.msra.mxu0 0
      %1788 = vmatprep.subr.bf16.mxu0 0
      %1789 = vmatpush1.bf16.msra.mxu0 0
      %1790 = vmatprep.subr.bf16.mxu0 0
      %1791 = vmatpush1.bf16.msra.mxu0 0
      %1792 = vmatprep.subr.bf16.mxu0 0
      %1793 = vmatpush1.bf16.msra.mxu0 0
      %1794 = vmatprep.subr.bf16.mxu0 0
      %1795 = vmatpush1.bf16.msra.mxu0 0
      %1796 = vmatprep.mubr.bf16.mxu0 0
      %1797 = vmatmul.mubr.bf16.gmra.mrb[0].mxu0 %v911
      %v1798 = vpop.f32.mrb[0].mxu0
      %v1799 = vadd.f32 0.0, %v1798
      %v1800 = vpop.f32.mrb[0].mxu0
      %v1801 = vpop.f32.mrb[0].mxu0
      %v1802 = vadd.f32 0.0, %v1801
      %v1803 = vpop.f32.mrb[0].mxu0
      %1804 = vmatprep.mubr.bf16.mxu0 0
      %1805 = vmatmul.mubr.bf16.gmra.mrb[0].mxu0 %v914
      %v1806 = vpop.f32.mrb[0].mxu0
      %v1807 = vadd.f32 0.0, %v1806
      %v1808 = vpop.f32.mrb[0].mxu0
      %v1809 = vpop.f32.mrb[0].mxu0
      %v1810 = vadd.f32 0.0, %v1809
      %v1811 = vpop.f32.mrb[0].mxu0
      %1812 = vmatprep.mubr.bf16.mxu0 0
      %1813 = vmatmul.mubr.bf16.gmra.mrb[0].mxu0 %v917
      %v1814 = vpop.f32.mrb[0].mxu0
      %v1815 = vadd.f32 0.0, %v1814
      %v1816 = vpop.f32.mrb[0].mxu0
      %v1817 = vpop.f32.mrb[0].mxu0
      %v1818 = vadd.f32 0.0, %v1817
      %v1819 = vpop.f32.mrb[0].mxu0
      %1820 = vmatprep.mubr.bf16.mxu0 0
      %1821 = vmatmul.mubr.bf16.gmra.mrb[0].mxu0 %v920
      %v1822 = vpop.f32.mrb[0].mxu0
      %v1823 = vadd.f32 0.0, %v1822
      %v1824 = vpop.f32.mrb[0].mxu0
      %v1825 = vpop.f32.mrb[0].mxu0
      %v1826 = vadd.f32 0.0, %v1825
      %v1827 = vpop.f32.mrb[0].mxu0
      %1828 = vmatprep.mubr.bf16.mxu0 0
      %1829 = vmatmul.mubr.bf16.gmra.mrb[0].mxu0 %v923
      %v1830 = vpop.f32.mrb[0].mxu0
      %v1831 = vadd.f32 0.0, %v1830
      %v1832 = vpop.f32.mrb[0].mxu0
      %v1833 = vpop.f32.mrb[0].mxu0
      %v1834 = vadd.f32 0.0, %v1833
      %v1835 = vpop.f32.mrb[0].mxu0
      %1836 = vmatprep.mubr.bf16.mxu0 0
      %1837 = vmatmul.mubr.bf16.gmra.mrb[0].mxu0 %v926
      %v1838 = vpop.f32.mrb[0].mxu0
      %v1839 = vadd.f32 0.0, %v1838
      %v1840 = vpop.f32.mrb[0].mxu0
      %v1841 = vpop.f32.mrb[0].mxu0
      %v1842 = vadd.f32 0.0, %v1841
      %v1843 = vpop.f32.mrb[0].mxu0
      %1844 = vmatprep.mubr.bf16.mxu0 0
      %1845 = vmatmul.mubr.bf16.gmra.mrb[0].mxu0 %v1344
      %v1846 = vpop.f32.mrb[0].mxu0
      %v1847 = vadd.f32 0.0, %v1846
      %v1848 = vpop.f32.mrb[0].mxu0
      %v1849 = vpop.f32.mrb[0].mxu0
      %v1850 = vadd.f32 0.0, %v1849
      %v1851 = vpop.f32.mrb[0].mxu0
      %1852 = vmatprep.mubr.bf16.mxu0 0
      %1853 = vmatmul.mubr.bf16.gmra.mrb[0].mxu0 %v1762
      %v1854 = vpop.f32.mrb[0].mxu0
      %v1855 = vadd.f32 0.0, %v1854
      %v1856 = vpop.f32.mrb[0].mxu0
      %v1857 = vpop.f32.mrb[0].mxu0
      %v1858 = vadd.f32 0.0, %v1857
      %v1859 = vpop.f32.mrb[0].mxu0
      %1860 = vdwg.mxu0
      %v1861 = vadd.f32 %v1725, %v1799
      %v1862 = vadd.f32 %v1726, %v1802
      %v1863 = vadd.f32 %v1727, %v1807
      %v1864 = vadd.f32 %v1728, %v1810
      %v1865 = vadd.f32 %v1729, %v1815
      %v1866 = vadd.f32 %v1730, %v1818
      %v1867 = vadd.f32 %v1731, %v1823
      %v1868 = vadd.f32 %v1732, %v1826
      %v1869 = vadd.f32 %v1733, %v1831
      %v1870 = vadd.f32 %v1734, %v1834
      %v1871 = vadd.f32 %v1735, %v1839
      %v1872 = vadd.f32 %v1736, %v1842
      %v1873 = vadd.f32 %v1737, %v1847
      %v1874 = vadd.f32 %v1738, %v1850
      %v1875 = vadd.f32 %v1739, %v1855
      %v1876 = vadd.f32 %v1740, %v1858
      %v1877 = vld [vmem:[%s2] sm:$0x1]
      %v1879 = vlaneseq
      %v1880 = vshrl.u32 %v1879, 7
      %v1881 = vsub.s32 0, %v1880
      %v1882 = vrot.slane %v1877, %v1881
      %v1884 = vadd.f32 %v1861, %v1882
      %v1885 = vadd.f32 %v1862, %v1882
      %v1886 = vadd.f32 %v1863, %v1882
      %v1887 = vadd.f32 %v1864, %v1882
      %v1888 = vadd.f32 %v1865, %v1882
      %v1889 = vadd.f32 %v1866, %v1882
      %v1890 = vadd.f32 %v1867, %v1882
      %v1891 = vadd.f32 %v1868, %v1882
      %v1892 = vadd.f32 %v1869, %v1882
      %v1893 = vadd.f32 %v1870, %v1882
      %v1894 = vadd.f32 %v1871, %v1882
      %v1895 = vadd.f32 %v1872, %v1882
      %v1896 = vadd.f32 %v1873, %v1882
      %v1897 = vadd.f32 %v1874, %v1882
      %v1898 = vadd.f32 %v1875, %v1882
      %v1899 = vadd.f32 %v1876, %v1882
      %v1900 = vadd.f32 %v1884, 3.0
      %v1901 = vadd.f32 %v1885, 3.0
      %v1902 = vadd.f32 %v1886, 3.0
      %v1903 = vadd.f32 %v1887, 3.0
      %v1904 = vadd.f32 %v1888, 3.0
      %v1905 = vadd.f32 %v1889, 3.0
      %v1906 = vadd.f32 %v1890, 3.0
      %v1907 = vadd.f32 %v1891, 3.0
      %v1908 = vadd.f32 %v1892, 3.0
      %v1909 = vadd.f32 %v1893, 3.0
      %v1910 = vadd.f32 %v1894, 3.0
      %v1911 = vadd.f32 %v1895, 3.0
      %v1912 = vadd.f32 %v1896, 3.0
      %v1913 = vadd.f32 %v1897, 3.0
      %v1914 = vadd.f32 %v1898, 3.0
      %v1915 = vadd.f32 %v1899, 3.0
      %v1916 = vmax.f32 %v1900, 0.0
      %v1917 = vmax.f32 %v1901, 0.0
      %v1918 = vmax.f32 %v1902, 0.0
      %v1919 = vmax.f32 %v1903, 0.0
      %v1920 = vmax.f32 %v1904, 0.0
      %v1921 = vmax.f32 %v1905, 0.0
      %v1922 = vmax.f32 %v1906, 0.0
      %v1923 = vmax.f32 %v1907, 0.0
      %v1924 = vmax.f32 %v1908, 0.0
      %v1925 = vmax.f32 %v1909, 0.0
      %v1926 = vmax.f32 %v1910, 0.0
      %v1927 = vmax.f32 %v1911, 0.0
      %v1928 = vmax.f32 %v1912, 0.0
      %v1929 = vmax.f32 %v1913, 0.0
      %v1930 = vmax.f32 %v1914, 0.0
      %v1931 = vmax.f32 %v1915, 0.0
      %v1932 = vmin.f32 %v1916, 6.0
      %v1933 = vmin.f32 %v1917, 6.0
      %v1934 = vmin.f32 %v1918, 6.0
      %v1935 = vmin.f32 %v1919, 6.0
      %v1936 = vmin.f32 %v1920, 6.0
      %v1937 = vmin.f32 %v1921, 6.0
      %v1938 = vmin.f32 %v1922, 6.0
      %v1939 = vmin.f32 %v1923, 6.0
      %v1940 = vmin.f32 %v1924, 6.0
      %v1941 = vmin.f32 %v1925, 6.0
      %v1942 = vmin.f32 %v1926, 6.0
      %v1943 = vmin.f32 %v1927, 6.0
      %v1944 = vmin.f32 %v1928, 6.0
      %v1945 = vmin.f32 %v1929, 6.0
      %v1946 = vmin.f32 %v1930, 6.0
      %v1947 = vmin.f32 %v1931, 6.0
      %v1948 = vmul.f32 %v1884, %v1932
      %v1949 = vmul.f32 %v1885, %v1933
      %v1950 = vmul.f32 %v1886, %v1934
      %v1951 = vmul.f32 %v1887, %v1935
      %v1952 = vmul.f32 %v1888, %v1936
      %v1953 = vmul.f32 %v1889, %v1937
      %v1954 = vmul.f32 %v1890, %v1938
      %v1955 = vmul.f32 %v1891, %v1939
      %v1956 = vmul.f32 %v1892, %v1940
      %v1957 = vmul.f32 %v1893, %v1941
      %v1958 = vmul.f32 %v1894, %v1942
      %v1959 = vmul.f32 %v1895, %v1943
      %v1960 = vmul.f32 %v1896, %v1944
      %v1961 = vmul.f32 %v1897, %v1945
      %v1962 = vmul.f32 %v1898, %v1946
      %v1963 = vmul.f32 %v1899, %v1947
      %v1964 = vmul.f32 %v1948, 0.16666667
      %v1965 = vmul.f32 %v1949, 0.16666667
      %v1966 = vmul.f32 %v1950, 0.16666667
      %v1967 = vmul.f32 %v1951, 0.16666667
      %v1968 = vmul.f32 %v1952, 0.16666667
      %v1969 = vmul.f32 %v1953, 0.16666667
      %v1970 = vmul.f32 %v1954, 0.16666667
      %v1971 = vmul.f32 %v1955, 0.16666667
      %v1972 = vmul.f32 %v1956, 0.16666667
      %v1973 = vmul.f32 %v1957, 0.16666667
      %v1974 = vmul.f32 %v1958, 0.16666667
      %v1975 = vmul.f32 %v1959, 0.16666667
      %v1976 = vmul.f32 %v1960, 0.16666667
      %v1977 = vmul.f32 %v1961, 0.16666667
      %v1978 = vmul.f32 %v1962, 0.16666667
      %v1979 = vmul.f32 %v1963, 0.16666667
      %v1980 = vpack.c.bf16 %v1965, %v1964
      %v1981 = vpack.c.bf16 %v1967, %v1966
      %v1982 = vpack.c.bf16 %v1969, %v1968
      %v1983 = vpack.c.bf16 %v1971, %v1970
      %v1984 = vpack.c.bf16 %v1973, %v1972
      %v1985 = vpack.c.bf16 %v1975, %v1974
      %v1986 = vpack.c.bf16 %v1977, %v1976
      %v1987 = vpack.c.bf16 %v1979, %v1978
      %v1988 = vld [vmem:[%s3] sm:$0xf]
      %v1989 = vld [vmem:[%s3 + $0x4] sm:$0xf]
      %v1990 = vld [vmem:[%s3 + $0x8] sm:$0xf]
      %v1991 = vld [vmem:[%s3 + $0xc] sm:$0xf]
      %v1992 = vld [vmem:[%s3 + $0x10] sm:$0xf]
      %v1993 = vld [vmem:[%s3 + $0x14] sm:$0xf]
      %v1994 = vld [vmem:[%s3 + $0x18] sm:$0xf]
      %v1995 = vld [vmem:[%s3 + $0x1c] sm:$0xf]
      %v1996 = vld [vmem:[%s3 + $0x20] sm:$0xf]
      %v1997 = vld [vmem:[%s3 + $0x24] sm:$0xf]
      %v1998 = vld [vmem:[%s3 + $0x28] sm:$0xf]
      %v1999 = vld [vmem:[%s3 + $0x2c] sm:$0xf]
      %v2000 = vld [vmem:[%s3 + $0x30] sm:$0xf]
      %v2001 = vld [vmem:[%s3 + $0x34] sm:$0xf]
      %v2002 = vld [vmem:[%s3 + $0x38] sm:$0xf]
      %v2003 = vld [vmem:[%s3 + $0x3c] sm:$0xf]
      %v2004 = vld [vmem:[%s4] sm:$0x1]
      %v2006 = vlaneseq
      %v2007 = vshrl.u32 %v2006, 7
      %v2008 = vsub.s32 0, %v2007
      %v2009 = vrot.slane %v2004, %v2008
      %v2027 = vunpack.c.l.b16 %v1988
      %v2028 = vunpack.c.l.b16 %v1989
      %v2029 = vunpack.c.l.b16 %v1990
      %v2030 = vunpack.c.l.b16 %v1991
      %v2031 = vunpack.c.l.b16 %v1992
      %v2032 = vunpack.c.l.b16 %v1993
      %v2033 = vunpack.c.l.b16 %v1994
      %v2034 = vunpack.c.l.b16 %v1995
      %v2035 = vunpack.c.l.b16 %v1996
      %v2036 = vunpack.c.l.b16 %v1997
      %v2037 = vunpack.c.l.b16 %v1998
      %v2038 = vunpack.c.l.b16 %v1999
      %v2039 = vunpack.c.l.b16 %v2000
      %v2040 = vunpack.c.l.b16 %v2001
      %v2041 = vunpack.c.l.b16 %v2002
      %v2042 = vunpack.c.l.b16 %v2003
      %v2043 = vpack.c.b16 %v2028, %v2027
      %v2044 = vpack.c.b16 %v2030, %v2029
      %v2045 = vpack.c.b16 %v2032, %v2031
      %v2046 = vpack.c.b16 %v2034, %v2033
      %v2047 = vpack.c.b16 %v2036, %v2035
      %v2048 = vpack.c.b16 %v2038, %v2037
      %v2049 = vpack.c.b16 %v2040, %v2039
      %v2050 = vpack.c.b16 %v2042, %v2041
      %2059 = vmatprep.subr.bf16.mxu0 0
      %2060 = vmatpush1.bf16.msra.mxu0 %v2043
      %2061 = vmatprep.subr.bf16.mxu0 0
      %2062 = vmatpush1.bf16.msra.mxu0 %v2044
      %2063 = vmatprep.subr.bf16.mxu0 0
      %2064 = vmatpush1.bf16.msra.mxu0 %v2045
      %2065 = vmatprep.subr.bf16.mxu0 0
      %2066 = vmatpush1.bf16.msra.mxu0 %v2046
      %2067 = vmatprep.subr.bf16.mxu0 0
      %2068 = vmatpush1.bf16.msra.mxu0 %v2047
      %2069 = vmatprep.subr.bf16.mxu0 0
      %2070 = vmatpush1.bf16.msra.mxu0 %v2048
      %2071 = vmatprep.subr.bf16.mxu0 0
      %2072 = vmatpush1.bf16.msra.mxu0 %v2049
      %2073 = vmatprep.subr.bf16.mxu0 0
      %2074 = vmatpush1.bf16.msra.mxu0 %v2050
      %2075 = vmatprep.subr.bf16.mxu0 0
      %2076 = vmatpush1.bf16.msra.mxu0 0
      %2077 = vmatprep.subr.bf16.mxu0 0
      %2078 = vmatpush1.bf16.msra.mxu0 0
      %2079 = vmatprep.subr.bf16.mxu0 0
      %2080 = vmatpush1.bf16.msra.mxu0 0
      %2081 = vmatprep.subr.bf16.mxu0 0
      %2082 = vmatpush1.bf16.msra.mxu0 0
      %2083 = vmatprep.subr.bf16.mxu0 0
      %2084 = vmatpush1.bf16.msra.mxu0 0
      %2085 = vmatprep.subr.bf16.mxu0 0
      %2086 = vmatpush1.bf16.msra.mxu0 0
      %2087 = vmatprep.subr.bf16.mxu0 0
      %2088 = vmatpush1.bf16.msra.mxu0 0
      %2089 = vmatprep.subr.bf16.mxu0 0
      %2090 = vmatpush1.bf16.msra.mxu0 0
      %2091 = vmatprep.mubr.bf16.mxu0 0
      %2092 = vmatmul.mubr.bf16.gmra.mrb[0].mxu0 %v1980
      %v2093 = vpop.f32.mrb[0].mxu0
      %v2094 = vadd.f32 %v2009, %v2093
      %v2095 = vpop.f32.mrb[0].mxu0
      %v2096 = vpop.f32.mrb[0].mxu0
      %v2097 = vadd.f32 %v2009, %v2096
      %v2098 = vpop.f32.mrb[0].mxu0
      %2099 = vmatprep.mubr.bf16.mxu0 0
      %2100 = vmatmul.mubr.bf16.gmra.mrb[0].mxu0 %v1981
      %v2101 = vpop.f32.mrb[0].mxu0
      %v2102 = vadd.f32 %v2009, %v2101
      %v2103 = vpop.f32.mrb[0].mxu0
      %v2104 = vpop.f32.mrb[0].mxu0
      %v2105 = vadd.f32 %v2009, %v2104
      %v2106 = vpop.f32.mrb[0].mxu0
      %2107 = vmatprep.mubr.bf16.mxu0 0
      %2108 = vmatmul.mubr.bf16.gmra.mrb[0].mxu0 %v1982
      %v2109 = vpop.f32.mrb[0].mxu0
      %v2110 = vadd.f32 %v2009, %v2109
      %v2111 = vpop.f32.mrb[0].mxu0
      %v2112 = vpop.f32.mrb[0].mxu0
      %v2113 = vadd.f32 %v2009, %v2112
      %v2114 = vpop.f32.mrb[0].mxu0
      %2115 = vmatprep.mubr.bf16.mxu0 0
      %2116 = vmatmul.mubr.bf16.gmra.mrb[0].mxu0 %v1983
      %v2117 = vpop.f32.mrb[0].mxu0
      %v2118 = vadd.f32 %v2009, %v2117
      %v2119 = vpop.f32.mrb[0].mxu0
      %v2120 = vpop.f32.mrb[0].mxu0
      %v2121 = vadd.f32 %v2009, %v2120
      %v2122 = vpop.f32.mrb[0].mxu0
      %2123 = vmatprep.mubr.bf16.mxu0 0
      %2124 = vmatmul.mubr.bf16.gmra.mrb[0].mxu0 %v1984
      %v2125 = vpop.f32.mrb[0].mxu0
      %v2126 = vadd.f32 %v2009, %v2125
      %v2127 = vpop.f32.mrb[0].mxu0
      %v2128 = vpop.f32.mrb[0].mxu0
      %v2129 = vadd.f32 %v2009, %v2128
      %v2130 = vpop.f32.mrb[0].mxu0
      %2131 = vmatprep.mubr.bf16.mxu0 0
      %2132 = vmatmul.mubr.bf16.gmra.mrb[0].mxu0 %v1985
      %v2133 = vpop.f32.mrb[0].mxu0
      %v2134 = vadd.f32 %v2009, %v2133
      %v2135 = vpop.f32.mrb[0].mxu0
      %v2136 = vpop.f32.mrb[0].mxu0
      %v2137 = vadd.f32 %v2009, %v2136
      %v2138 = vpop.f32.mrb[0].mxu0
      %2139 = vmatprep.mubr.bf16.mxu0 0
      %2140 = vmatmul.mubr.bf16.gmra.mrb[0].mxu0 %v1986
      %v2141 = vpop.f32.mrb[0].mxu0
      %v2142 = vadd.f32 %v2009, %v2141
      %v2143 = vpop.f32.mrb[0].mxu0
      %v2144 = vpop.f32.mrb[0].mxu0
      %v2145 = vadd.f32 %v2009, %v2144
      %v2146 = vpop.f32.mrb[0].mxu0
      %2147 = vmatprep.mubr.bf16.mxu0 0
      %2148 = vmatmul.mubr.bf16.gmra.mrb[0].mxu0 %v1987
      %v2149 = vpop.f32.mrb[0].mxu0
      %v2150 = vadd.f32 %v2009, %v2149
      %v2151 = vpop.f32.mrb[0].mxu0
      %v2152 = vpop.f32.mrb[0].mxu0
      %v2153 = vadd.f32 %v2009, %v2152
      %v2154 = vpop.f32.mrb[0].mxu0
      %2155 = vdwg.mxu0
      %2156 = vst [vmem:[%s248] sm:$0xff] %v2094
      %2157 = vst [vmem:[%s248 + $0x8] sm:$0xff] %v2097
      %2158 = vst [vmem:[%s248 + $0x10] sm:$0xff] %v2102
      %2159 = vst [vmem:[%s248 + $0x18] sm:$0xff] %v2105
      %2160 = vst [vmem:[%s248 + $0x20] sm:$0xff] %v2110
      %2161 = vst [vmem:[%s248 + $0x28] sm:$0xff] %v2113
      %2162 = vst [vmem:[%s248 + $0x30] sm:$0xff] %v2118
      %2163 = vst [vmem:[%s248 + $0x38] sm:$0xff] %v2121
      %2164 = vst [vmem:[%s248 + $0x40] sm:$0xff] %v2126
      %2165 = vst [vmem:[%s248 + $0x48] sm:$0xff] %v2129
      %2166 = vst [vmem:[%s248 + $0x50] sm:$0xff] %v2134
      %2167 = vst [vmem:[%s248 + $0x58] sm:$0xff] %v2137
      %2168 = vst [vmem:[%s248 + $0x60] sm:$0xff] %v2142
      %2169 = vst [vmem:[%s248 + $0x68] sm:$0xff] %v2145
      %2170 = vst [vmem:[%s248 + $0x70] sm:$0xff] %v2150
      %2171 = vst [vmem:[%s248 + $0x78] sm:$0xff] %v2153
      %s2172 = smul.u32 8, %s21
      %p2173 = scmp.lt.s32.totalorder %s20, 1
      %s2174 = scalar_select %p2173, %s20, 1
      %p2175 = scmp.lt.s32.totalorder %s2172, 15
      %s2176 = scalar_select %p2175, %s2172, 15
      %s2177 = smul.addr %s2176, 2
      %s2178 = smul.addr %s2174, 32
      %s2179 = sadd.s32 %s2177, %s2178
      %s2180 = smul.addr %s2179, 8
      %s2181 = scalar_lea.vmem %s5, %s2180
      // Predicated region
      $region41: #{fused_mbconv_forward.1} parent=39 // pred_check
        %p2182 = pneg %p158
      $region42: #{fused_mbconv_forward.1} parent=39 // pred_check_branch
        %2184 = sbr.rel (%p2182) target = $region44
      $region43: #{fused_mbconv_forward.1} parent=39 // pred_region
        %s2185 = smul.u32 8, %s21
      $region44: #{fused_mbconv_forward.1} parent=39 // pred_fallthru
        _
    $region40: #{fused_mbconv_forward.1} parent=5 // pred_fallthru
      _
    %p2186 = scmp.le.s32.totalorder 2, %s11
    // Predicated region
    $region45: #{fused_mbconv_forward.1} parent=5 // pred_check
      %p2187 = pneg %p2186
    $region46: #{fused_mbconv_forward.1} parent=5 // pred_check_branch
      %2189 = sbr.rel (%p2187) target = $region48
    $region47: #{fused_mbconv_forward.1} parent=5 // pred_region
      %s2190 = ssub.s32 %s11, 2
      // Predicated region
      $region49: #{fused_mbconv_forward.1} parent=47 // pred_check
        %p2191 = pneg %p164
      $region50: #{fused_mbconv_forward.1} parent=47 // pred_check_branch
        %2193 = sbr.rel (%p2191) target = $region52
      $region51: #{fused_mbconv_forward.1} parent=47 // pred_region
        %s2194 = smul.u32 8, %s23
        %p2195 = scmp.lt.s32.totalorder %s22, 1
        %s2196 = scalar_select %p2195, %s22, 1
        %p2197 = scmp.lt.s32.totalorder %s2194, 15
        %s2198 = scalar_select %p2197, %s2194, 15
        %s2199 = smul.addr %s2198, 2
        %s2200 = smul.addr %s2196, 32
        %s2201 = sadd.s32 %s2199, %s2200
        %s2202 = smul.addr %s2201, 8
        %s2203 = scalar_lea.vmem %s5, %s2202
      $region52: #{fused_mbconv_forward.1} parent=47 // pred_fallthru
        _
    $region48: #{fused_mbconv_forward.1} parent=5 // pred_fallthru
      _
  $region6: #{fused_mbconv_forward.1} parent=0 // loop_footer
    %s15 = sadd.s32 1, %s11
  $region7: #{fused_mbconv_forward.1} parent=0 // loop_footer_branch
    %10 = sbr.rel target = $region3
  $region8: #{fused_mbconv_forward.1} parent=0 // loop_exit
    _

</llo_original>
